<compile_context>
chip_gen: v7x
topology: tpu7x:2x2x1
jax: 0.10.0
libtpu: 0.0.40
codegen_flags: <defaults>
</compile_context>

<pallas_src>
import functools

import jax
import jax.numpy as jnp
from jax import lax
from jax.experimental import pallas as pl
from jax.experimental.pallas import tpu as pltpu

INPUT_SIZE = 39
HIDDEN_SIZES = [512, 384, 256, 128, 64]
OUTPUT_SIZE = 1
LN_EPS = 1e-5          # nn.LayerNorm default
K_PAD = 128            # input features zero-padded 39 -> 128 (zeros contribute nothing)
PVEC_ROWS = 16         # 5 layers x (bias, gamma, beta) + final-layer weight row
PVEC_W = max(HIDDEN_SIZES)


def _round_up(n, m):
    return ((n + m - 1) // m) * m


def _pick_tm(batch):
    """Batch tile: 16-row multiples (bf16 (16,128) tile); >=2 grid steps for moderate/large
    batches (v7x has 2 TensorCores); cap at 1024 rows (amortizes ~0.35us/step overhead,
    still only a few MiB of VMEM activations)."""
    if batch <= 32:
        return _round_up(batch, 16)
    if batch >= 2048:
        return 1024
    return min(1024, _round_up((batch + 1) // 2, 16))


def _bf16_vpu_available():
    """bf16 VALU exists on v6e / v7x; keep f32 elementwise math on older gens."""
    try:
        kind = jax.devices()[0].device_kind.lower()
    except Exception:
        return False
    return not any(t in kind for t in ("v2", "v3", "v4", "v5"))


def _mlp_kernel(n_hidden, use_bf16_affine, x_ref, *refs):
    # refs: w_0..w_{n_hidden-1}, pvec_ref, b_out_ref, out_ref
    out_ref = refs[-1]          # (1, TM) f32  (lane-dense: batch along lanes)
    b_out_ref = refs[-2]        # (1, 1) f32
    pvec_ref = refs[-3]         # (16, 512) f32 packed bias/gamma/beta (+ w_out row)
    w_refs = refs[:n_hidden]

    h = x_ref[...]                                           # (TM, K_PAD) bf16
    for i in range(n_hidden):
        w_ref = w_refs[i]
        n = w_ref.shape[-1]
        b = pvec_ref[3 * i: 3 * i + 1, 0:n]                  # (1, n) f32, static slices
        g = pvec_ref[3 * i + 1: 3 * i + 2, 0:n]
        be = pvec_ref[3 * i + 2: 3 * i + 3, 0:n]

        # Linear on the MXU: bf16 x bf16 -> f32 accumulate
        z = jnp.dot(h, w_ref[...], preferred_element_type=jnp.float32) + b

        # LayerNorm: centered variance in f32 (XLU reductions, rsqrt on EUP)
        mean = jnp.sum(z, axis=-1, keepdims=True) * (1.0 / n)
        zc = z - mean
        var = jnp.sum(zc * zc, axis=-1, keepdims=True) * (1.0 / n)
        zn = zc * lax.rsqrt(var + LN_EPS)

        # Affine + ReLU (+ bf16 feed cast for the next MXU pass)
        if use_bf16_affine:
            h = jnp.maximum(zn.astype(jnp.bfloat16) * g.astype(jnp.bfloat16)
                            + be.astype(jnp.bfloat16), 0)
        else:
            h = jnp.maximum(zn * g + be, 0.0).astype(jnp.bfloat16)
        # Dropout: inference-mode identity.

    # Final Linear on the MXU, emitted lane-dense: (1,64) . (TM,64)^T -> (1, TM)
    w_out = pvec_ref[3 * n_hidden: 3 * n_hidden + 1, 0:HIDDEN_SIZES[-1]].astype(jnp.bfloat16)
    out_row = lax.dot_general(w_out, h, (((1,), (1,)), ((), ())),
                              preferred_element_type=jnp.float32)      # (1, TM)
    out_ref[...] = (out_row + b_out_ref[...]).astype(out_ref.dtype)


def make_params(key):
    """Kernel-ready params mirroring the PyTorch __init__ (xavier_uniform_ weights, zero
    biases, LayerNorm gamma=1 / beta=0), pre-packed for the TPU layout:
      - hidden weights transposed to (in, out), bf16, W1 zero-padded 39->128 on K,
      - all (1,N) bias/gamma/beta vectors + the final-layer weight row packed into one
        (16, 512) f32 block (row 3i=bias, 3i+1=gamma, 3i+2=beta, row 15 = w_out[0:64]),
      - final bias as a (1,1) f32 array."""
    sizes = [INPUT_SIZE] + HIDDEN_SIZES
    weights = []
    pvec = jnp.zeros((PVEC_ROWS, PVEC_W), jnp.float32)
    for i in range(len(HIDDEN_SIZES)):
        fan_in, fan_out = sizes[i], sizes[i + 1]
        key, sub = jax.random.split(key)
        bound = (6.0 / (fan_in + fan_out)) ** 0.5
        w = jax.random.uniform(sub, (fan_in, fan_out), jnp.float32, -bound, bound)
        if i == 0:
            w = jnp.pad(w, ((0, K_PAD - fan_in), (0, 0)))
        weights.append(w.astype(jnp.bfloat16))
        # bias row already zeros; gamma row = ones; beta row already zeros
        pvec = pvec.at[3 * i + 1, :fan_out].set(1.0)
    fan_in, fan_out = HIDDEN_SIZES[-1], OUTPUT_SIZE
    key, sub = jax.random.split(key)
    bound = (6.0 / (fan_in + fan_out)) ** 0.5
    w_out = jax.random.uniform(sub, (fan_out, fan_in), jnp.float32, -bound, bound)  # (1, 64)
    pvec = pvec.at[3 * len(HIDDEN_SIZES), :fan_in].set(w_out[0])
    b_out = jnp.zeros((1, OUTPUT_SIZE), jnp.float32)
    return tuple(weights) + (pvec, b_out)


@functools.partial(jax.jit, static_argnames=("use_bf16_affine",))
def mlp_forward(x, params, use_bf16_affine=False):
    *weights, pvec, b_out = params
    batch, feat = x.shape
    tm = _pick_tm(batch)
    padded_batch = _round_up(batch, tm)
    n_steps = padded_batch // tm

    xb = jnp.pad(x.astype(jnp.bfloat16),
                 ((0, padded_batch - batch), (0, K_PAD - feat)))

    x_spec = pl.BlockSpec((tm, K_PAD), lambda i: (i, 0))
    w_specs = [pl.BlockSpec(w.shape, lambda i: (0, 0)) for w in weights]   # resident
    pvec_spec = pl.BlockSpec(pvec.shape, lambda i: (0, 0))                 # resident
    b_out_spec = pl.BlockSpec(b_out.shape, lambda i: (0, 0))               # resident
    # Lane-dense output: one (1, tm) row per grid step; leading grid dim squeezed.
    out_spec = pl.BlockSpec((None, 1, tm), lambda i: (i, 0, 0))

    dims = [K_PAD] + HIDDEN_SIZES
    flops_per_row = 2 * (sum(dims[i] * dims[i + 1] for i in range(len(HIDDEN_SIZES)))
                         + HIDDEN_SIZES[-1] * OUTPUT_SIZE)
    param_bytes = (sum(w.size * w.dtype.itemsize for w in weights)
                   + pvec.size * 4 + b_out.size * 4)
    cost = pl.CostEstimate(
        flops=flops_per_row * padded_batch,
        transcendentals=len(HIDDEN_SIZES) * padded_batch,        # rsqrt per row per layer
        bytes_accessed=xb.size * 2 + param_bytes + padded_batch * 4,
    )

    kernel = functools.partial(_mlp_kernel, len(HIDDEN_SIZES), use_bf16_affine)
    out = pl.pallas_call(
        kernel,
        out_shape=jax.ShapeDtypeStruct((n_steps, 1, tm), jnp.float32),
        grid=(n_steps,),
        in_specs=[x_spec] + w_specs + [pvec_spec, b_out_spec],
        out_specs=out_spec,
        compiler_params=pltpu.CompilerParams(
            dimension_semantics=("parallel",),
            vmem_limit_bytes=48 << 20,
        ),
        cost_estimate=cost,
    )(xb, *weights, pvec, b_out)
    return out.reshape(padded_batch, 1)[:batch]


def mlp_reference(x, params, use_bf16_affine=False):
    """Pure-JAX reference mirroring the kernel math (bf16 MXU operands, f32 LN)."""
    *weights, pvec, b_out = params
    feat = x.shape[1]
    h = jnp.pad(x.astype(jnp.bfloat16), ((0, 0), (0, K_PAD - feat)))
    for i, w in enumerate(weights):
        n = w.shape[-1]
        b, g, be = pvec[3 * i, :n], pvec[3 * i + 1, :n], pvec[3 * i + 2, :n]
        z = jnp.dot(h, w, preferred_element_type=jnp.float32) + b
        mean = jnp.mean(z, axis=-1, keepdims=True)
        zc = z - mean
        var = jnp.mean(zc * zc, axis=-1, keepdims=True)
        zn = zc * lax.rsqrt(var + LN_EPS)
        if use_bf16_affine:
            h = jnp.maximum(zn.astype(jnp.bfloat16) * g.astype(jnp.bfloat16)
                            + be.astype(jnp.bfloat16), 0)
        else:
            h = jnp.maximum(zn * g + be, 0.0).astype(jnp.bfloat16)
    w_out = pvec[3 * len(weights):3 * len(weights) + 1, :HIDDEN_SIZES[-1]].astype(jnp.bfloat16)
    out = lax.dot_general(h, w_out, (((1,), (1,)), ((), ())),
                          preferred_element_type=jnp.float32)     # (batch, 1)
    return out + b_out


if __name__ == "__main__":
    key = jax.random.PRNGKey(0)
    key_x, key_p = jax.random.split(key)
    use_bf16_affine = _bf16_vpu_available()

    params = make_params(key_p)

    # Small batch (not a multiple of 16) -> single-step grid, 16-row tile.
    batch = 13
    x = jax.random.normal(key_x, (batch, INPUT_SIZE), jnp.float32)
    out = jax.block_until_ready(mlp_forward(x, params, use_bf16_affine=use_bf16_affine))
    ref = mlp_reference(x, params, use_bf16_affine=use_bf16_affine)
    assert out.shape == (batch, OUTPUT_SIZE), out.shape
    err = float(jnp.max(jnp.abs(out - ref)))
    assert jnp.allclose(out, ref, atol=2e-3, rtol=2e-3), err

    # Moderate batch -> multi-step grid exercises the lane-dense (1, TM) output path.
    batch2 = 100
    x2 = jax.random.normal(key_x, (batch2, INPUT_SIZE), jnp.float32)
    out2 = jax.block_until_ready(mlp_forward(x2, params, use_bf16_affine=use_bf16_affine))
    ref2 = mlp_reference(x2, params, use_bf16_affine=use_bf16_affine)
    assert out2.shape == (batch2, OUTPUT_SIZE), out2.shape
    err2 = float(jnp.max(jnp.abs(out2 - ref2)))
    assert jnp.allclose(out2, ref2, atol=2e-3, rtol=2e-3), err2

    print("KERNEL_OK")
</pallas_src>

<mosaic_0001>
module attributes {stable_mosaic.version = 11 : i64} {
  func.func @_mlp_kernel(%arg0: i32, %arg1: memref<16x128xbf16, #tpu.memory_space<vmem>>, %arg2: memref<128x512xbf16, #tpu.memory_space<vmem>>, %arg3: memref<512x384xbf16, #tpu.memory_space<vmem>>, %arg4: memref<384x256xbf16, #tpu.memory_space<vmem>>, %arg5: memref<256x128xbf16, #tpu.memory_space<vmem>>, %arg6: memref<128x64xbf16, #tpu.memory_space<vmem>>, %arg7: memref<16x512xf32, #tpu.memory_space<vmem>>, %arg8: memref<1x1xf32, #tpu.memory_space<vmem>>, %arg9: memref<1x1x16xf32, #tpu.memory_space<vmem>>) attributes {dimension_semantics = [#tpu.dimension_semantics<parallel>], iteration_bounds = array<i64: 1>, scalar_prefetch = 0 : i64, scratch_operands = 0 : i64, tpu.core_type = #tpu.core_type<tc>, window_params = [{transform_indices = @transform_0, window_bounds = array<i64: 16, 128>}, {pipeline_mode = #tpu.pipeline_mode<synchronous>, transform_indices = @transform_1, window_bounds = array<i64: 128, 512>}, {pipeline_mode = #tpu.pipeline_mode<synchronous>, transform_indices = @transform_2, window_bounds = array<i64: 512, 384>}, {pipeline_mode = #tpu.pipeline_mode<synchronous>, transform_indices = @transform_3, window_bounds = array<i64: 384, 256>}, {pipeline_mode = #tpu.pipeline_mode<synchronous>, transform_indices = @transform_4, window_bounds = array<i64: 256, 128>}, {pipeline_mode = #tpu.pipeline_mode<synchronous>, transform_indices = @transform_5, window_bounds = array<i64: 128, 64>}, {pipeline_mode = #tpu.pipeline_mode<synchronous>, transform_indices = @transform_6, window_bounds = array<i64: 16, 512>}, {pipeline_mode = #tpu.pipeline_mode<synchronous>, transform_indices = @transform_7, window_bounds = array<i64: 1, 1>}, {transform_indices = @transform_8, window_bounds = array<i64: 1, 1, 16>}]} {
    %c0 = arith.constant 0 : index
    %c0_0 = arith.constant 0 : index
    %0 = vector.load %arg1[%c0, %c0_0] : memref<16x128xbf16, #tpu.memory_space<vmem>>, vector<16x128xbf16>
    %c0_1 = arith.constant 0 : index
    %c0_2 = arith.constant 0 : index
    %1 = vector.load %arg7[%c0_1, %c0_2] : memref<16x512xf32, #tpu.memory_space<vmem>>, vector<1x512xf32>
    %c1 = arith.constant 1 : index
    %c0_3 = arith.constant 0 : index
    %2 = vector.load %arg7[%c1, %c0_3] : memref<16x512xf32, #tpu.memory_space<vmem>>, vector<1x512xf32>
    %c2 = arith.constant 2 : index
    %c0_4 = arith.constant 0 : index
    %3 = vector.load %arg7[%c2, %c0_4] : memref<16x512xf32, #tpu.memory_space<vmem>>, vector<1x512xf32>
    %c0_5 = arith.constant 0 : index
    %c0_6 = arith.constant 0 : index
    %4 = vector.load %arg2[%c0_5, %c0_6] : memref<128x512xbf16, #tpu.memory_space<vmem>>, vector<128x512xbf16>
    %cst = arith.constant dense<0.000000e+00> : vector<16x512xf32>
    %5 = tpu.matmul %0, %4, %cst {dimension_numbers = #tpu.dot_dimension_numbers<[1], [0], [0], [1], [0, 0, 1, 1], [], []>} : vector<16x128xbf16>, vector<128x512xbf16>, vector<16x512xf32> -> vector<16x512xf32>
    %6 = vector.broadcast %1 : vector<1x512xf32> to vector<16x512xf32>
    %7 = arith.addf %5, %6 : vector<16x512xf32>
    %cst_7 = arith.constant dense<0.000000e+00> : vector<16xf32>
    %8 = vector.multi_reduction <add>, %7, %cst_7 [1] : vector<16x512xf32> to vector<16xf32>
    %9 = vector.shape_cast %8 : vector<16xf32> to vector<16x1xf32>
    %cst_8 = arith.constant 0.001953125 : f32
    %10 = vector.broadcast %cst_8 : f32 to vector<16x1xf32>
    %11 = arith.mulf %9, %10 : vector<16x1xf32>
    %12 = vector.broadcast %11 : vector<16x1xf32> to vector<16x512xf32>
    %13 = arith.subf %7, %12 : vector<16x512xf32>
    %14 = arith.mulf %13, %13 : vector<16x512xf32>
    %cst_9 = arith.constant dense<0.000000e+00> : vector<16xf32>
    %15 = vector.multi_reduction <add>, %14, %cst_9 [1] : vector<16x512xf32> to vector<16xf32>
    %16 = vector.shape_cast %15 : vector<16xf32> to vector<16x1xf32>
    %cst_10 = arith.constant 0.001953125 : f32
    %17 = vector.broadcast %cst_10 : f32 to vector<16x1xf32>
    %18 = arith.mulf %16, %17 : vector<16x1xf32>
    %cst_11 = arith.constant 9.99999974E-6 : f32
    %19 = vector.broadcast %cst_11 : f32 to vector<16x1xf32>
    %20 = arith.addf %18, %19 : vector<16x1xf32>
    %21 = math.rsqrt %20 : vector<16x1xf32>
    %22 = vector.broadcast %21 : vector<16x1xf32> to vector<16x512xf32>
    %23 = arith.mulf %13, %22 : vector<16x512xf32>
    %24 = arith.truncf %23 : vector<16x512xf32> to vector<16x512xbf16>
    %25 = arith.truncf %2 : vector<1x512xf32> to vector<1x512xbf16>
    %26 = vector.broadcast %25 : vector<1x512xbf16> to vector<16x512xbf16>
    %27 = arith.mulf %24, %26 : vector<16x512xbf16>
    %28 = arith.truncf %3 : vector<1x512xf32> to vector<1x512xbf16>
    %29 = vector.broadcast %28 : vector<1x512xbf16> to vector<16x512xbf16>
    %30 = arith.addf %27, %29 : vector<16x512xbf16>
    %cst_12 = arith.constant 0.000000e+00 : bf16
    %31 = vector.broadcast %cst_12 : bf16 to vector<16x512xbf16>
    %32 = arith.maximumf %30, %31 : vector<16x512xbf16>
    %c3 = arith.constant 3 : index
    %c0_13 = arith.constant 0 : index
    %33 = vector.load %arg7[%c3, %c0_13] : memref<16x512xf32, #tpu.memory_space<vmem>>, vector<1x384xf32>
    %c4 = arith.constant 4 : index
    %c0_14 = arith.constant 0 : index
    %34 = vector.load %arg7[%c4, %c0_14] : memref<16x512xf32, #tpu.memory_space<vmem>>, vector<1x384xf32>
    %c5 = arith.constant 5 : index
    %c0_15 = arith.constant 0 : index
    %35 = vector.load %arg7[%c5, %c0_15] : memref<16x512xf32, #tpu.memory_space<vmem>>, vector<1x384xf32>
    %c0_16 = arith.constant 0 : index
    %c0_17 = arith.constant 0 : index
    %36 = vector.load %arg3[%c0_16, %c0_17] : memref<512x384xbf16, #tpu.memory_space<vmem>>, vector<512x384xbf16>
    %cst_18 = arith.constant dense<0.000000e+00> : vector<16x384xf32>
    %37 = tpu.matmul %32, %36, %cst_18 {dimension_numbers = #tpu.dot_dimension_numbers<[1], [0], [0], [1], [0, 0, 1, 1], [], []>} : vector<16x512xbf16>, vector<512x384xbf16>, vector<16x384xf32> -> vector<16x384xf32>
    %38 = vector.broadcast %33 : vector<1x384xf32> to vector<16x384xf32>
    %39 = arith.addf %37, %38 : vector<16x384xf32>
    %cst_19 = arith.constant dense<0.000000e+00> : vector<16xf32>
    %40 = vector.multi_reduction <add>, %39, %cst_19 [1] : vector<16x384xf32> to vector<16xf32>
    %41 = vector.shape_cast %40 : vector<16xf32> to vector<16x1xf32>
    %cst_20 = arith.constant 0.00260416674 : f32
    %42 = vector.broadcast %cst_20 : f32 to vector<16x1xf32>
    %43 = arith.mulf %41, %42 : vector<16x1xf32>
    %44 = vector.broadcast %43 : vector<16x1xf32> to vector<16x384xf32>
    %45 = arith.subf %39, %44 : vector<16x384xf32>
    %46 = arith.mulf %45, %45 : vector<16x384xf32>
    %cst_21 = arith.constant dense<0.000000e+00> : vector<16xf32>
    %47 = vector.multi_reduction <add>, %46, %cst_21 [1] : vector<16x384xf32> to vector<16xf32>
    %48 = vector.shape_cast %47 : vector<16xf32> to vector<16x1xf32>
    %cst_22 = arith.constant 0.00260416674 : f32
    %49 = vector.broadcast %cst_22 : f32 to vector<16x1xf32>
    %50 = arith.mulf %48, %49 : vector<16x1xf32>
    %cst_23 = arith.constant 9.99999974E-6 : f32
    %51 = vector.broadcast %cst_23 : f32 to vector<16x1xf32>
    %52 = arith.addf %50, %51 : vector<16x1xf32>
    %53 = math.rsqrt %52 : vector<16x1xf32>
    %54 = vector.broadcast %53 : vector<16x1xf32> to vector<16x384xf32>
    %55 = arith.mulf %45, %54 : vector<16x384xf32>
    %56 = arith.truncf %55 : vector<16x384xf32> to vector<16x384xbf16>
    %57 = arith.truncf %34 : vector<1x384xf32> to vector<1x384xbf16>
    %58 = vector.broadcast %57 : vector<1x384xbf16> to vector<16x384xbf16>
    %59 = arith.mulf %56, %58 : vector<16x384xbf16>
    %60 = arith.truncf %35 : vector<1x384xf32> to vector<1x384xbf16>
    %61 = vector.broadcast %60 : vector<1x384xbf16> to vector<16x384xbf16>
    %62 = arith.addf %59, %61 : vector<16x384xbf16>
    %cst_24 = arith.constant 0.000000e+00 : bf16
    %63 = vector.broadcast %cst_24 : bf16 to vector<16x384xbf16>
    %64 = arith.maximumf %62, %63 : vector<16x384xbf16>
    %c6 = arith.constant 6 : index
    %c0_25 = arith.constant 0 : index
    %65 = vector.load %arg7[%c6, %c0_25] : memref<16x512xf32, #tpu.memory_space<vmem>>, vector<1x256xf32>
    %c7 = arith.constant 7 : index
    %c0_26 = arith.constant 0 : index
    %66 = vector.load %arg7[%c7, %c0_26] : memref<16x512xf32, #tpu.memory_space<vmem>>, vector<1x256xf32>
    %c8 = arith.constant 8 : index
    %c0_27 = arith.constant 0 : index
    %67 = vector.load %arg7[%c8, %c0_27] : memref<16x512xf32, #tpu.memory_space<vmem>>, vector<1x256xf32>
    %c0_28 = arith.constant 0 : index
    %c0_29 = arith.constant 0 : index
    %68 = vector.load %arg4[%c0_28, %c0_29] : memref<384x256xbf16, #tpu.memory_space<vmem>>, vector<384x256xbf16>
    %cst_30 = arith.constant dense<0.000000e+00> : vector<16x256xf32>
    %69 = tpu.matmul %64, %68, %cst_30 {dimension_numbers = #tpu.dot_dimension_numbers<[1], [0], [0], [1], [0, 0, 1, 1], [], []>} : vector<16x384xbf16>, vector<384x256xbf16>, vector<16x256xf32> -> vector<16x256xf32>
    %70 = vector.broadcast %65 : vector<1x256xf32> to vector<16x256xf32>
    %71 = arith.addf %69, %70 : vector<16x256xf32>
    %cst_31 = arith.constant dense<0.000000e+00> : vector<16xf32>
    %72 = vector.multi_reduction <add>, %71, %cst_31 [1] : vector<16x256xf32> to vector<16xf32>
    %73 = vector.shape_cast %72 : vector<16xf32> to vector<16x1xf32>
    %cst_32 = arith.constant 3.906250e-03 : f32
    %74 = vector.broadcast %cst_32 : f32 to vector<16x1xf32>
    %75 = arith.mulf %73, %74 : vector<16x1xf32>
    %76 = vector.broadcast %75 : vector<16x1xf32> to vector<16x256xf32>
    %77 = arith.subf %71, %76 : vector<16x256xf32>
    %78 = arith.mulf %77, %77 : vector<16x256xf32>
    %cst_33 = arith.constant dense<0.000000e+00> : vector<16xf32>
    %79 = vector.multi_reduction <add>, %78, %cst_33 [1] : vector<16x256xf32> to vector<16xf32>
    %80 = vector.shape_cast %79 : vector<16xf32> to vector<16x1xf32>
    %cst_34 = arith.constant 3.906250e-03 : f32
    %81 = vector.broadcast %cst_34 : f32 to vector<16x1xf32>
    %82 = arith.mulf %80, %81 : vector<16x1xf32>
    %cst_35 = arith.constant 9.99999974E-6 : f32
    %83 = vector.broadcast %cst_35 : f32 to vector<16x1xf32>
    %84 = arith.addf %82, %83 : vector<16x1xf32>
    %85 = math.rsqrt %84 : vector<16x1xf32>
    %86 = vector.broadcast %85 : vector<16x1xf32> to vector<16x256xf32>
    %87 = arith.mulf %77, %86 : vector<16x256xf32>
    %88 = arith.truncf %87 : vector<16x256xf32> to vector<16x256xbf16>
    %89 = arith.truncf %66 : vector<1x256xf32> to vector<1x256xbf16>
    %90 = vector.broadcast %89 : vector<1x256xbf16> to vector<16x256xbf16>
    %91 = arith.mulf %88, %90 : vector<16x256xbf16>
    %92 = arith.truncf %67 : vector<1x256xf32> to vector<1x256xbf16>
    %93 = vector.broadcast %92 : vector<1x256xbf16> to vector<16x256xbf16>
    %94 = arith.addf %91, %93 : vector<16x256xbf16>
    %cst_36 = arith.constant 0.000000e+00 : bf16
    %95 = vector.broadcast %cst_36 : bf16 to vector<16x256xbf16>
    %96 = arith.maximumf %94, %95 : vector<16x256xbf16>
    %c9 = arith.constant 9 : index
    %c0_37 = arith.constant 0 : index
    %97 = vector.load %arg7[%c9, %c0_37] : memref<16x512xf32, #tpu.memory_space<vmem>>, vector<1x128xf32>
    %c10 = arith.constant 10 : index
    %c0_38 = arith.constant 0 : index
    %98 = vector.load %arg7[%c10, %c0_38] : memref<16x512xf32, #tpu.memory_space<vmem>>, vector<1x128xf32>
    %c11 = arith.constant 11 : index
    %c0_39 = arith.constant 0 : index
    %99 = vector.load %arg7[%c11, %c0_39] : memref<16x512xf32, #tpu.memory_space<vmem>>, vector<1x128xf32>
    %c0_40 = arith.constant 0 : index
    %c0_41 = arith.constant 0 : index
    %100 = vector.load %arg5[%c0_40, %c0_41] : memref<256x128xbf16, #tpu.memory_space<vmem>>, vector<256x128xbf16>
    %cst_42 = arith.constant dense<0.000000e+00> : vector<16x128xf32>
    %101 = tpu.matmul %96, %100, %cst_42 {dimension_numbers = #tpu.dot_dimension_numbers<[1], [0], [0], [1], [0, 0, 1, 1], [], []>} : vector<16x256xbf16>, vector<256x128xbf16>, vector<16x128xf32> -> vector<16x128xf32>
    %102 = vector.broadcast %97 : vector<1x128xf32> to vector<16x128xf32>
    %103 = arith.addf %101, %102 : vector<16x128xf32>
    %cst_43 = arith.constant dense<0.000000e+00> : vector<16xf32>
    %104 = vector.multi_reduction <add>, %103, %cst_43 [1] : vector<16x128xf32> to vector<16xf32>
    %105 = vector.shape_cast %104 : vector<16xf32> to vector<16x1xf32>
    %cst_44 = arith.constant 7.812500e-03 : f32
    %106 = vector.broadcast %cst_44 : f32 to vector<16x1xf32>
    %107 = arith.mulf %105, %106 : vector<16x1xf32>
    %108 = vector.broadcast %107 : vector<16x1xf32> to vector<16x128xf32>
    %109 = arith.subf %103, %108 : vector<16x128xf32>
    %110 = arith.mulf %109, %109 : vector<16x128xf32>
    %cst_45 = arith.constant dense<0.000000e+00> : vector<16xf32>
    %111 = vector.multi_reduction <add>, %110, %cst_45 [1] : vector<16x128xf32> to vector<16xf32>
    %112 = vector.shape_cast %111 : vector<16xf32> to vector<16x1xf32>
    %cst_46 = arith.constant 7.812500e-03 : f32
    %113 = vector.broadcast %cst_46 : f32 to vector<16x1xf32>
    %114 = arith.mulf %112, %113 : vector<16x1xf32>
    %cst_47 = arith.constant 9.99999974E-6 : f32
    %115 = vector.broadcast %cst_47 : f32 to vector<16x1xf32>
    %116 = arith.addf %114, %115 : vector<16x1xf32>
    %117 = math.rsqrt %116 : vector<16x1xf32>
    %118 = vector.broadcast %117 : vector<16x1xf32> to vector<16x128xf32>
    %119 = arith.mulf %109, %118 : vector<16x128xf32>
    %120 = arith.truncf %119 : vector<16x128xf32> to vector<16x128xbf16>
    %121 = arith.truncf %98 : vector<1x128xf32> to vector<1x128xbf16>
    %122 = vector.broadcast %121 : vector<1x128xbf16> to vector<16x128xbf16>
    %123 = arith.mulf %120, %122 : vector<16x128xbf16>
    %124 = arith.truncf %99 : vector<1x128xf32> to vector<1x128xbf16>
    %125 = vector.broadcast %124 : vector<1x128xbf16> to vector<16x128xbf16>
    %126 = arith.addf %123, %125 : vector<16x128xbf16>
    %cst_48 = arith.constant 0.000000e+00 : bf16
    %127 = vector.broadcast %cst_48 : bf16 to vector<16x128xbf16>
    %128 = arith.maximumf %126, %127 : vector<16x128xbf16>
    %c12 = arith.constant 12 : index
    %c0_49 = arith.constant 0 : index
    %129 = vector.load %arg7[%c12, %c0_49] : memref<16x512xf32, #tpu.memory_space<vmem>>, vector<1x64xf32>
    %c13 = arith.constant 13 : index
    %c0_50 = arith.constant 0 : index
    %130 = vector.load %arg7[%c13, %c0_50] : memref<16x512xf32, #tpu.memory_space<vmem>>, vector<1x64xf32>
    %c14 = arith.constant 14 : index
    %c0_51 = arith.constant 0 : index
    %131 = vector.load %arg7[%c14, %c0_51] : memref<16x512xf32, #tpu.memory_space<vmem>>, vector<1x64xf32>
    %c0_52 = arith.constant 0 : index
    %c0_53 = arith.constant 0 : index
    %132 = vector.load %arg6[%c0_52, %c0_53] : memref<128x64xbf16, #tpu.memory_space<vmem>>, vector<128x64xbf16>
    %cst_54 = arith.constant dense<0.000000e+00> : vector<16x64xf32>
    %133 = tpu.matmul %128, %132, %cst_54 {dimension_numbers = #tpu.dot_dimension_numbers<[1], [0], [0], [1], [0, 0, 1, 1], [], []>} : vector<16x128xbf16>, vector<128x64xbf16>, vector<16x64xf32> -> vector<16x64xf32>
    %134 = vector.broadcast %129 : vector<1x64xf32> to vector<16x64xf32>
    %135 = arith.addf %133, %134 : vector<16x64xf32>
    %cst_55 = arith.constant dense<0.000000e+00> : vector<16xf32>
    %136 = vector.multi_reduction <add>, %135, %cst_55 [1] : vector<16x64xf32> to vector<16xf32>
    %137 = vector.shape_cast %136 : vector<16xf32> to vector<16x1xf32>
    %cst_56 = arith.constant 1.562500e-02 : f32
    %138 = vector.broadcast %cst_56 : f32 to vector<16x1xf32>
    %139 = arith.mulf %137, %138 : vector<16x1xf32>
    %140 = vector.broadcast %139 : vector<16x1xf32> to vector<16x64xf32>
    %141 = arith.subf %135, %140 : vector<16x64xf32>
    %142 = arith.mulf %141, %141 : vector<16x64xf32>
    %cst_57 = arith.constant dense<0.000000e+00> : vector<16xf32>
    %143 = vector.multi_reduction <add>, %142, %cst_57 [1] : vector<16x64xf32> to vector<16xf32>
    %144 = vector.shape_cast %143 : vector<16xf32> to vector<16x1xf32>
    %cst_58 = arith.constant 1.562500e-02 : f32
    %145 = vector.broadcast %cst_58 : f32 to vector<16x1xf32>
    %146 = arith.mulf %144, %145 : vector<16x1xf32>
    %cst_59 = arith.constant 9.99999974E-6 : f32
    %147 = vector.broadcast %cst_59 : f32 to vector<16x1xf32>
    %148 = arith.addf %146, %147 : vector<16x1xf32>
    %149 = math.rsqrt %148 : vector<16x1xf32>
    %150 = vector.broadcast %149 : vector<16x1xf32> to vector<16x64xf32>
    %151 = arith.mulf %141, %150 : vector<16x64xf32>
    %152 = arith.truncf %151 : vector<16x64xf32> to vector<16x64xbf16>
    %153 = arith.truncf %130 : vector<1x64xf32> to vector<1x64xbf16>
    %154 = vector.broadcast %153 : vector<1x64xbf16> to vector<16x64xbf16>
    %155 = arith.mulf %152, %154 : vector<16x64xbf16>
    %156 = arith.truncf %131 : vector<1x64xf32> to vector<1x64xbf16>
    %157 = vector.broadcast %156 : vector<1x64xbf16> to vector<16x64xbf16>
    %158 = arith.addf %155, %157 : vector<16x64xbf16>
    %cst_60 = arith.constant 0.000000e+00 : bf16
    %159 = vector.broadcast %cst_60 : bf16 to vector<16x64xbf16>
    %160 = arith.maximumf %158, %159 : vector<16x64xbf16>
    %c15 = arith.constant 15 : index
    %c0_61 = arith.constant 0 : index
    %161 = vector.load %arg7[%c15, %c0_61] : memref<16x512xf32, #tpu.memory_space<vmem>>, vector<1x64xf32>
    %162 = arith.truncf %161 : vector<1x64xf32> to vector<1x64xbf16>
    %cst_62 = arith.constant dense<0.000000e+00> : vector<1x16xf32>
    %163 = tpu.matmul %162, %160, %cst_62 {dimension_numbers = #tpu.dot_dimension_numbers<[1], [1], [0], [0], [0, 0, 1, 0], [], []>} : vector<1x64xbf16>, vector<16x64xbf16>, vector<1x16xf32> -> vector<1x16xf32>
    %c0_63 = arith.constant 0 : index
    %c0_64 = arith.constant 0 : index
    %164 = vector.load %arg8[%c0_63, %c0_64] : memref<1x1xf32, #tpu.memory_space<vmem>>, vector<1x1xf32>
    %165 = vector.broadcast %164 : vector<1x1xf32> to vector<1x16xf32>
    %166 = arith.addf %163, %165 : vector<1x16xf32>
    %c0_65 = arith.constant 0 : index
    %c0_66 = arith.constant 0 : index
    %c0_67 = arith.constant 0 : index
    %167 = vector.load %arg9[%c0_65, %c0_66, %c0_67] : memref<1x1x16xf32, #tpu.memory_space<vmem>>, vector<1x1x16xf32>
    %168 = vector.shape_cast %167 : vector<1x1x16xf32> to vector<1x16xf32>
    %169 = vector.shape_cast %166 : vector<1x16xf32> to vector<1x1x16xf32>
    tpu.vector_store %arg9[%c0_65, %c0_66, %c0_67], %169 {strides = array<i32>} : memref<1x1x16xf32, #tpu.memory_space<vmem>>, vector<1x1x16xf32>,
    return
  }
  func.func @transform_0(%arg0: i32) -> (i32, i32) {
    %c0_i32 = arith.constant 0 : i32
    %c0_i32_0 = arith.constant 0 : i32
    return %arg0, %c0_i32 : i32, i32
  }
  func.func @transform_1(%arg0: i32) -> (i32, i32) {
    %c0_i32 = arith.constant 0 : i32
    %c0_i32_0 = arith.constant 0 : i32
    %c0_i32_1 = arith.constant 0 : i32
    return %c0_i32, %c0_i32_0 : i32, i32
  }
  func.func @transform_2(%arg0: i32) -> (i32, i32) {
    %c0_i32 = arith.constant 0 : i32
    %c0_i32_0 = arith.constant 0 : i32
    %c0_i32_1 = arith.constant 0 : i32
    return %c0_i32, %c0_i32_0 : i32, i32
  }
  func.func @transform_3(%arg0: i32) -> (i32, i32) {
    %c0_i32 = arith.constant 0 : i32
    %c0_i32_0 = arith.constant 0 : i32
    %c0_i32_1 = arith.constant 0 : i32
    return %c0_i32, %c0_i32_0 : i32, i32
  }
  func.func @transform_4(%arg0: i32) -> (i32, i32) {
    %c0_i32 = arith.constant 0 : i32
    %c0_i32_0 = arith.constant 0 : i32
    %c0_i32_1 = arith.constant 0 : i32
    return %c0_i32, %c0_i32_0 : i32, i32
  }
  func.func @transform_5(%arg0: i32) -> (i32, i32) {
    %c0_i32 = arith.constant 0 : i32
    %c0_i32_0 = arith.constant 0 : i32
    %c0_i32_1 = arith.constant 0 : i32
    return %c0_i32, %c0_i32_0 : i32, i32
  }
  func.func @transform_6(%arg0: i32) -> (i32, i32) {
    %c0_i32 = arith.constant 0 : i32
    %c0_i32_0 = arith.constant 0 : i32
    %c0_i32_1 = arith.constant 0 : i32
    return %c0_i32, %c0_i32_0 : i32, i32
  }
  func.func @transform_7(%arg0: i32) -> (i32, i32) {
    %c0_i32 = arith.constant 0 : i32
    %c0_i32_0 = arith.constant 0 : i32
    %c0_i32_1 = arith.constant 0 : i32
    return %c0_i32, %c0_i32_0 : i32, i32
  }
  func.func @transform_8(%arg0: i32) -> (i32, i32, i32) {
    %c0_i32 = arith.constant 0 : i32
    %c0_i32_0 = arith.constant 0 : i32
    %c0_i32_1 = arith.constant 0 : i32
    return %arg0, %c0_i32, %c0_i32_0 : i32, i32, i32
  }
}

</mosaic_0001>

<llo_original>
// kernel: mlp_forward.1
$region0: #{mlp_forward.1}
  #allocation0 [shape = 'u32[]', space=smem, size = 0x4, offset = 0x4, fixed_abs, tag = 'smem constant byte address 0x4 - core index']
  #allocation1 [shape = 'u32[144,128]{1,0:T(1,128)}', space=vmem, size = 0x12000, scoped, tag = 'internal scratch']
  #allocation2 [shape = 'f32[1,1]{1,0:T(1,128)S(1)}', space=vmem, size = 0x200, scoped, tag = 'scoped memory for mlp_forward.1']
  %s0 = inlined_call_operand.vmem [shape: bf16[16,128], index: 0, kind: input, shape index: {}]
  %s1 = inlined_call_operand.hbm [shape: bf16[128,512], index: 1, kind: input, shape index: {}]
  %s2 = inlined_call_operand.hbm [shape: bf16[512,384], index: 2, kind: input, shape index: {}]
  %s3 = inlined_call_operand.hbm [shape: bf16[384,256], index: 3, kind: input, shape index: {}]
  %s4 = inlined_call_operand.vmem [shape: bf16[256,128], index: 4, kind: input, shape index: {}]
  %s5 = inlined_call_operand.vmem [shape: bf16[128,64], index: 5, kind: input, shape index: {}]
  %s6 = inlined_call_operand.hbm [shape: f32[16,512], index: 6, kind: input, shape index: {}]
  %s7 = inlined_call_operand.<no memory space> [shape: f32[1,1], index: 7, kind: input, shape index: {}]
  %s8 = inlined_call_operand.vmem [shape: f32[1,1,16], index: 8, kind: output, shape index: {}]
  %s9 = sld [smem:[#allocation0]]
  $region58: #{mlp_forward.1} parent=0
    _
  %s11 = ssub.s32 1, %s9
  %s12 = scalar_select 0, %s11, %s9
  %v13 = vstv %s7
  %14 = vst [vmem:[#allocation2] sm:$0x1] %v13
  $region1: #{mlp_forward.1} parent=0
    #allocation3 [shape = 'u8[131072]{0}', space=vmem, size = 0x20000, scoped, tag = 'input window, operand 1, single buffered']
    #allocation4 [shape = 's32[1]{0}', space=sflag, size = 0x4, scoped, tag = 'scoped memory for mlp_forward.1']
    #allocation5 [shape = 'u8[393216]{0}', space=vmem, size = 0x60000, scoped, tag = 'input window, operand 2, single buffered']
    #allocation6 [shape = 's32[1]{0}', space=sflag, size = 0x4, scoped, tag = 'scoped memory for mlp_forward.1']
    #allocation7 [shape = 'u8[196608]{0}', space=vmem, size = 0x30000, scoped, tag = 'input window, operand 3, single buffered']
    #allocation8 [shape = 'u8[32768]{0}', space=vmem, size = 0x8000, scoped, tag = 'input window, operand 6, single buffered']
    #allocation9 [shape = 's32[1]{0}', space=sflag, size = 0x4, scoped, tag = 'scoped memory for mlp_forward.1']
    %15 = vsyncpa [#allocation4], 0
    %16 = vsyncpa [#allocation6], 0
    %17 = vsyncpa [#allocation9], 0
    // Predicated region
    $region2: #{mlp_forward.1} parent=1 // pred_check
      _
    $region3: #{mlp_forward.1} parent=1 // pred_check_branch
      %19 = sbr.rel (0) target = $region5
    $region4: #{mlp_forward.1} parent=1 // pred_region
      _
    $region5: #{mlp_forward.1} parent=1 // pred_fallthru
      _
    // Predicated region
    $region6: #{mlp_forward.1} parent=1 // pred_check
      _
    $region7: #{mlp_forward.1} parent=1 // pred_check_branch
      %21 = sbr.rel (0) target = $region9
    $region8: #{mlp_forward.1} parent=1 // pred_region
      %s23 = ssub.s32 4096, 4096
      %24 = vsyncadd [#allocation4], %s23
      %s25 = sshll.u32 [#allocation3], 4
      %s26 = int_to_ptr.vmem [resolvable:$true] %s25
      %31 = dma.hbm_to_vmem [thread:$0]  %s1, 4096, %s26, [#allocation4], 256, 256, 16
    $region9: #{mlp_forward.1} parent=1 // pred_fallthru
      _
    // Predicated region
    $region10: #{mlp_forward.1} parent=1 // pred_check
      _
    $region11: #{mlp_forward.1} parent=1 // pred_check_branch
      %33 = sbr.rel (0) target = $region13
    $region12: #{mlp_forward.1} parent=1 // pred_region
      %s35 = ssub.s32 12288, 12288
      %36 = vsyncadd [#allocation6], %s35
      %s37 = sshll.u32 [#allocation5], 4
      %s38 = int_to_ptr.vmem [resolvable:$true] %s37
      %43 = dma.hbm_to_vmem [thread:$0]  %s2, 12288, %s38, [#allocation6], 192, 192, 12
    $region13: #{mlp_forward.1} parent=1 // pred_fallthru
      _
    // Predicated region
    $region14: #{mlp_forward.1} parent=1 // pred_check
      _
    $region15: #{mlp_forward.1} parent=1 // pred_check_branch
      %45 = sbr.rel (0) target = $region17
    $region16: #{mlp_forward.1} parent=1 // pred_region
      %s47 = ssub.s32 6144, 6144
      %48 = vsyncadd [#allocation6], %s47
      %s49 = sshll.u32 [#allocation7], 4
      %s50 = int_to_ptr.vmem [resolvable:$true] %s49
      %55 = dma.hbm_to_vmem [thread:$0]  %s3, 6144, %s50, [#allocation6], 128, 128, 8
    $region17: #{mlp_forward.1} parent=1 // pred_fallthru
      _
    // Predicated region
    $region18: #{mlp_forward.1} parent=1 // pred_check
      _
    $region19: #{mlp_forward.1} parent=1 // pred_check_branch
      %57 = sbr.rel (0) target = $region21
    $region20: #{mlp_forward.1} parent=1 // pred_region
      _
    $region21: #{mlp_forward.1} parent=1 // pred_fallthru
      _
    // Predicated region
    $region22: #{mlp_forward.1} parent=1 // pred_check
      _
    $region23: #{mlp_forward.1} parent=1 // pred_check_branch
      %59 = sbr.rel (0) target = $region25
    $region24: #{mlp_forward.1} parent=1 // pred_region
      _
    $region25: #{mlp_forward.1} parent=1 // pred_fallthru
      _
    // Predicated region
    $region26: #{mlp_forward.1} parent=1 // pred_check
      _
    $region27: #{mlp_forward.1} parent=1 // pred_check_branch
      %61 = sbr.rel (0) target = $region29
    $region28: #{mlp_forward.1} parent=1 // pred_region
      %s63 = ssub.s32 1024, 1024
      %64 = vsyncadd [#allocation9], %s63
      %s65 = sshll.u32 [#allocation8], 4
      %s66 = int_to_ptr.vmem [resolvable:$true] %s65
      %71 = dma.hbm_to_vmem [thread:$0]  %s6, 1024, %s66, [#allocation9], 512, 512, 32
    $region29: #{mlp_forward.1} parent=1 // pred_fallthru
      _
    // Predicated region
    $region30: #{mlp_forward.1} parent=1 // pred_check
      _
    $region31: #{mlp_forward.1} parent=1 // pred_check_branch
      %73 = sbr.rel (0) target = $region33
    $region32: #{mlp_forward.1} parent=1 // pred_region
      _
    $region33: #{mlp_forward.1} parent=1 // pred_fallthru
      _
    // Predicated region
    $region34: #{mlp_forward.1} parent=1 // pred_check
      _
    $region35: #{mlp_forward.1} parent=1 // pred_check_branch
      %75 = sbr.rel (0) target = $region37
    $region36: #{mlp_forward.1} parent=1 // pred_region
      %76 = dma.done [#allocation4], 4096
    $region37: #{mlp_forward.1} parent=1 // pred_fallthru
      _
    // Predicated region
    $region38: #{mlp_forward.1} parent=1 // pred_check
      _
    $region39: #{mlp_forward.1} parent=1 // pred_check_branch
      %78 = sbr.rel (0) target = $region41
    $region40: #{mlp_forward.1} parent=1 // pred_region
      %79 = dma.done [#allocation6], 12288
    $region41: #{mlp_forward.1} parent=1 // pred_fallthru
      _
    // Predicated region
    $region42: #{mlp_forward.1} parent=1 // pred_check
      _
    $region43: #{mlp_forward.1} parent=1 // pred_check_branch
      %81 = sbr.rel (0) target = $region45
    $region44: #{mlp_forward.1} parent=1 // pred_region
      %82 = dma.done [#allocation6], 6144
    $region45: #{mlp_forward.1} parent=1 // pred_fallthru
      _
    // Predicated region
    $region46: #{mlp_forward.1} parent=1 // pred_check
      _
    $region47: #{mlp_forward.1} parent=1 // pred_check_branch
      %84 = sbr.rel (0) target = $region49
    $region48: #{mlp_forward.1} parent=1 // pred_region
      %85 = dma.done [#allocation9], 1024
    $region49: #{mlp_forward.1} parent=1 // pred_fallthru
      _
    %v87 = vld [vmem:[%s0] sm:$0xf]
    %v88 = vld [vmem:[%s0 + $0x4] sm:$0xf]
    %v89 = vld [vmem:[#allocation8] ss:$8 sm:$0xf]
    %s90 = scalar_lea.vmem [#allocation8], 1
    %v91 = vld [vmem:[%s90] ss:$8 sm:$0xf]
    %s92 = scalar_lea.vmem [#allocation8], 2
    %v93 = vld [vmem:[%s92] ss:$8 sm:$0xf]
    %v94 = vld [vmem:[#allocation3] sm:$0xff]
    %v95 = vld [vmem:[#allocation3 + $0x8] sm:$0xff]
    %v96 = vld [vmem:[#allocation3 + $0x10] sm:$0xff]
    %v97 = vld [vmem:[#allocation3 + $0x18] sm:$0xff]
    %v98 = vld [vmem:[#allocation3 + $0x20] sm:$0xff]
    %v99 = vld [vmem:[#allocation3 + $0x28] sm:$0xff]
    %v100 = vld [vmem:[#allocation3 + $0x30] sm:$0xff]
    %v101 = vld [vmem:[#allocation3 + $0x38] sm:$0xff]
    %v102 = vld [vmem:[#allocation3 + $0x40] sm:$0xff]
    %v103 = vld [vmem:[#allocation3 + $0x48] sm:$0xff]
    %v104 = vld [vmem:[#allocation3 + $0x50] sm:$0xff]
    %v105 = vld [vmem:[#allocation3 + $0x58] sm:$0xff]
    %v106 = vld [vmem:[#allocation3 + $0x60] sm:$0xff]
    %v107 = vld [vmem:[#allocation3 + $0x68] sm:$0xff]
    %v108 = vld [vmem:[#allocation3 + $0x70] sm:$0xff]
    %v109 = vld [vmem:[#allocation3 + $0x78] sm:$0xff]
    %v110 = vld [vmem:[#allocation3 + $0x80] sm:$0xff]
    %v111 = vld [vmem:[#allocation3 + $0x88] sm:$0xff]
    %v112 = vld [vmem:[#allocation3 + $0x90] sm:$0xff]
    %v113 = vld [vmem:[#allocation3 + $0x98] sm:$0xff]
    %v114 = vld [vmem:[#allocation3 + $0xa0] sm:$0xff]
    %v115 = vld [vmem:[#allocation3 + $0xa8] sm:$0xff]
    %v116 = vld [vmem:[#allocation3 + $0xb0] sm:$0xff]
    %v117 = vld [vmem:[#allocation3 + $0xb8] sm:$0xff]
    %v118 = vld [vmem:[#allocation3 + $0xc0] sm:$0xff]
    %v119 = vld [vmem:[#allocation3 + $0xc8] sm:$0xff]
    %v120 = vld [vmem:[#allocation3 + $0xd0] sm:$0xff]
    %v121 = vld [vmem:[#allocation3 + $0xd8] sm:$0xff]
    %v122 = vld [vmem:[#allocation3 + $0xe0] sm:$0xff]
    %v123 = vld [vmem:[#allocation3 + $0xe8] sm:$0xff]
    %v124 = vld [vmem:[#allocation3 + $0xf0] sm:$0xff]
    %v125 = vld [vmem:[#allocation3 + $0xf8] sm:$0xff]
    %v127 = vlaneseq
    %v128 = vshrl.u32 %v127, 7
    %v129 = vsub.s32 0, %v128
    %v130 = vrot.slane %v89, %v129
    %v131 = vlaneseq
    %v132 = vshrl.u32 %v131, 7
    %v133 = vsub.s32 1, %v132
    %v134 = vrot.slane %v89, %v133
    %v135 = vlaneseq
    %v136 = vshrl.u32 %v135, 7
    %v137 = vsub.s32 2, %v136
    %v138 = vrot.slane %v89, %v137
    %v139 = vlaneseq
    %v140 = vshrl.u32 %v139, 7
    %v141 = vsub.s32 3, %v140
    %v142 = vrot.slane %v89, %v141
    %v149 = vunpack.c.l.b16 %v87
    %v150 = vunpack.c.l.b16 %v88
    %v151 = vpack.c.b16 %v150, %v149
    %v185 = vunpack.c.l.b16 %v94
    %v186 = vunpack.c.h.b16 %v94
    %v187 = vunpack.c.l.b16 %v95
    %v188 = vunpack.c.h.b16 %v95
    %v189 = vunpack.c.l.b16 %v96
    %v190 = vunpack.c.h.b16 %v96
    %v191 = vunpack.c.l.b16 %v97
    %v192 = vunpack.c.h.b16 %v97
    %v193 = vunpack.c.l.b16 %v98
    %v194 = vunpack.c.h.b16 %v98
    %v195 = vunpack.c.l.b16 %v99
    %v196 = vunpack.c.h.b16 %v99
    %v197 = vunpack.c.l.b16 %v100
    %v198 = vunpack.c.h.b16 %v100
    %v199 = vunpack.c.l.b16 %v101
    %v200 = vunpack.c.h.b16 %v101
    %v201 = vunpack.c.l.b16 %v102
    %v202 = vunpack.c.h.b16 %v102
    %v203 = vunpack.c.l.b16 %v103
    %v204 = vunpack.c.h.b16 %v103
    %v205 = vunpack.c.l.b16 %v104
    %v206 = vunpack.c.h.b16 %v104
    %v207 = vunpack.c.l.b16 %v105
    %v208 = vunpack.c.h.b16 %v105
    %v209 = vunpack.c.l.b16 %v106
    %v210 = vunpack.c.h.b16 %v106
    %v211 = vunpack.c.l.b16 %v107
    %v212 = vunpack.c.h.b16 %v107
    %v213 = vunpack.c.l.b16 %v108
    %v214 = vunpack.c.h.b16 %v108
    %v215 = vunpack.c.l.b16 %v109
    %v216 = vunpack.c.h.b16 %v109
    %v217 = vunpack.c.l.b16 %v110
    %v218 = vunpack.c.h.b16 %v110
    %v219 = vunpack.c.l.b16 %v111
    %v220 = vunpack.c.h.b16 %v111
    %v221 = vunpack.c.l.b16 %v112
    %v222 = vunpack.c.h.b16 %v112
    %v223 = vunpack.c.l.b16 %v113
    %v224 = vunpack.c.h.b16 %v113
    %v225 = vunpack.c.l.b16 %v114
    %v226 = vunpack.c.h.b16 %v114
    %v227 = vunpack.c.l.b16 %v115
    %v228 = vunpack.c.h.b16 %v115
    %v229 = vunpack.c.l.b16 %v116
    %v230 = vunpack.c.h.b16 %v116
    %v231 = vunpack.c.l.b16 %v117
    %v232 = vunpack.c.h.b16 %v117
    %v233 = vunpack.c.l.b16 %v118
    %v234 = vunpack.c.h.b16 %v118
    %v235 = vunpack.c.l.b16 %v119
    %v236 = vunpack.c.h.b16 %v119
    %v237 = vunpack.c.l.b16 %v120
    %v238 = vunpack.c.h.b16 %v120
    %v239 = vunpack.c.l.b16 %v121
    %v240 = vunpack.c.h.b16 %v121
    %v241 = vunpack.c.l.b16 %v122
    %v242 = vunpack.c.h.b16 %v122
    %v243 = vunpack.c.l.b16 %v123
    %v244 = vunpack.c.h.b16 %v123
    %v245 = vunpack.c.l.b16 %v124
    %v246 = vunpack.c.h.b16 %v124
    %v247 = vunpack.c.l.b16 %v125
    %v248 = vunpack.c.h.b16 %v125
    %v249 = vpack.c.b16 %v189, %v185
    %v250 = vpack.c.b16 %v190, %v186
    %v251 = vpack.c.b16 %v191, %v187
    %v252 = vpack.c.b16 %v192, %v188
    %v253 = vpack.c.b16 %v197, %v193
    %v254 = vpack.c.b16 %v198, %v194
    %v255 = vpack.c.b16 %v199, %v195
    %v256 = vpack.c.b16 %v200, %v196
    %v257 = vpack.c.b16 %v205, %v201
    %v258 = vpack.c.b16 %v206, %v202
    %v259 = vpack.c.b16 %v207, %v203
    %v260 = vpack.c.b16 %v208, %v204
    %v261 = vpack.c.b16 %v213, %v209
    %v262 = vpack.c.b16 %v214, %v210
    %v263 = vpack.c.b16 %v215, %v211
    %v264 = vpack.c.b16 %v216, %v212
    %v265 = vpack.c.b16 %v221, %v217
    %v266 = vpack.c.b16 %v222, %v218
    %v267 = vpack.c.b16 %v223, %v219
    %v268 = vpack.c.b16 %v224, %v220
    %v269 = vpack.c.b16 %v229, %v225
    %v270 = vpack.c.b16 %v230, %v226
    %v271 = vpack.c.b16 %v231, %v227
    %v272 = vpack.c.b16 %v232, %v228
    %v273 = vpack.c.b16 %v237, %v233
    %v274 = vpack.c.b16 %v238, %v234
    %v275 = vpack.c.b16 %v239, %v235
    %v276 = vpack.c.b16 %v240, %v236
    %v277 = vpack.c.b16 %v245, %v241
    %v278 = vpack.c.b16 %v246, %v242
    %v279 = vpack.c.b16 %v247, %v243
    %v280 = vpack.c.b16 %v248, %v244
    %313 = vmatprep.subr.bf16.mxu0 %v250
    %314 = vmatpush1.bf16.msra.mxu0 %v249
    %315 = vmatprep.subr.bf16.mxu0 %v254
    %316 = vmatpush1.bf16.msra.mxu0 %v253
    %317 = vmatprep.subr.bf16.mxu0 %v258
    %318 = vmatpush1.bf16.msra.mxu0 %v257
    %319 = vmatprep.subr.bf16.mxu0 %v262
    %320 = vmatpush1.bf16.msra.mxu0 %v261
    %321 = vmatprep.subr.bf16.mxu0 %v266
    %322 = vmatpush1.bf16.msra.mxu0 %v265
    %323 = vmatprep.subr.bf16.mxu0 %v270
    %324 = vmatpush1.bf16.msra.mxu0 %v269
    %325 = vmatprep.subr.bf16.mxu0 %v274
    %326 = vmatpush1.bf16.msra.mxu0 %v273
    %327 = vmatprep.subr.bf16.mxu0 %v278
    %328 = vmatpush1.bf16.msra.mxu0 %v277
    %329 = vmatprep.subr.bf16.mxu0 0
    %330 = vmatpush1.bf16.msra.mxu0 0
    %331 = vmatprep.subr.bf16.mxu0 0
    %332 = vmatpush1.bf16.msra.mxu0 0
    %333 = vmatprep.subr.bf16.mxu0 0
    %334 = vmatpush1.bf16.msra.mxu0 0
    %335 = vmatprep.subr.bf16.mxu0 0
    %336 = vmatpush1.bf16.msra.mxu0 0
    %337 = vmatprep.subr.bf16.mxu0 0
    %338 = vmatpush1.bf16.msra.mxu0 0
    %339 = vmatprep.subr.bf16.mxu0 0
    %340 = vmatpush1.bf16.msra.mxu0 0
    %341 = vmatprep.subr.bf16.mxu0 0
    %342 = vmatpush1.bf16.msra.mxu0 0
    %343 = vmatprep.subr.bf16.mxu0 0
    %344 = vmatpush1.bf16.msra.mxu0 0
    %345 = vmatprep.mubr.bf16.mxu0 0
    %346 = vmatmul.mubr.bf16.gmra.mrb[0].mxu0 %v151
    %v347 = vpop.f32.mrb[0].mxu0
    %v348 = vadd.f32 %v130, %v347
    %v349 = vpop.f32.mrb[0].mxu0
    %v350 = vadd.f32 %v134, %v349
    %v351 = vpop.f32.mrb[0].mxu0
    %v352 = vadd.f32 %v130, %v351
    %v353 = vpop.f32.mrb[0].mxu0
    %v354 = vadd.f32 %v134, %v353
    %355 = vdwg.mxu0
    %356 = vmatprep.subr.bf16.mxu0 %v252
    %357 = vmatpush1.bf16.msra.mxu0 %v251
    %358 = vmatprep.subr.bf16.mxu0 %v256
    %359 = vmatpush1.bf16.msra.mxu0 %v255
    %360 = vmatprep.subr.bf16.mxu0 %v260
    %361 = vmatpush1.bf16.msra.mxu0 %v259
    %362 = vmatprep.subr.bf16.mxu0 %v264
    %363 = vmatpush1.bf16.msra.mxu0 %v263
    %364 = vmatprep.subr.bf16.mxu0 %v268
    %365 = vmatpush1.bf16.msra.mxu0 %v267
    %366 = vmatprep.subr.bf16.mxu0 %v272
    %367 = vmatpush1.bf16.msra.mxu0 %v271
    %368 = vmatprep.subr.bf16.mxu0 %v276
    %369 = vmatpush1.bf16.msra.mxu0 %v275
    %370 = vmatprep.subr.bf16.mxu0 %v280
    %371 = vmatpush1.bf16.msra.mxu0 %v279
    %372 = vmatprep.subr.bf16.mxu0 0
    %373 = vmatpush1.bf16.msra.mxu0 0
    %374 = vmatprep.subr.bf16.mxu0 0
    %375 = vmatpush1.bf16.msra.mxu0 0
    %376 = vmatprep.subr.bf16.mxu0 0
    %377 = vmatpush1.bf16.msra.mxu0 0
    %378 = vmatprep.subr.bf16.mxu0 0
    %379 = vmatpush1.bf16.msra.mxu0 0
    %380 = vmatprep.subr.bf16.mxu0 0
    %381 = vmatpush1.bf16.msra.mxu0 0
    %382 = vmatprep.subr.bf16.mxu0 0
    %383 = vmatpush1.bf16.msra.mxu0 0
    %384 = vmatprep.subr.bf16.mxu0 0
    %385 = vmatpush1.bf16.msra.mxu0 0
    %386 = vmatprep.subr.bf16.mxu0 0
    %387 = vmatpush1.bf16.msra.mxu0 0
    %388 = vmatprep.mubr.bf16.mxu0 0
    %389 = vmatmul.mubr.bf16.gmra.mrb[0].mxu0 %v151
    %v390 = vpop.f32.mrb[0].mxu0
    %v391 = vadd.f32 %v138, %v390
    %v392 = vpop.f32.mrb[0].mxu0
    %v393 = vadd.f32 %v142, %v392
    %v394 = vpop.f32.mrb[0].mxu0
    %v395 = vadd.f32 %v138, %v394
    %v396 = vpop.f32.mrb[0].mxu0
    %v397 = vadd.f32 %v142, %v396
    %398 = vdwg.mxu0
    %v399 = vadd.f32 %v348, %v350
    %v400 = vadd.f32 %v399, %v391
    %v401 = vadd.f32 %v400, %v393
    %402 = vadd.xlane.f32.xlu0 %v401
    %v403 = vpop.xlane.xlu0 %402
    %v404 = vadd.f32 %v352, %v354
    %v405 = vadd.f32 %v404, %v395
    %v406 = vadd.f32 %v405, %v397
    %407 = vadd.xlane.f32.xlu0 %v406
    %v408 = vpop.xlane.xlu0 %407
    %v409 = vmul.f32 %v403, 0.001953125
    %v410 = vmul.f32 %v408, 0.001953125
    %v411 = vsub.f32 %v348, %v409
    %v412 = vsub.f32 %v350, %v409
    %v413 = vsub.f32 %v391, %v409
    %v414 = vsub.f32 %v393, %v409
    %v415 = vsub.f32 %v352, %v410
    %v416 = vsub.f32 %v354, %v410
    %v417 = vsub.f32 %v395, %v410
    %v418 = vsub.f32 %v397, %v410
    %v419 = vmul.f32 %v411, %v411
    %v420 = vmul.f32 %v412, %v412
    %v421 = vmul.f32 %v413, %v413
    %v422 = vmul.f32 %v414, %v414
    %v423 = vmul.f32 %v415, %v415
    %v424 = vmul.f32 %v416, %v416
    %v425 = vmul.f32 %v417, %v417
    %v426 = vmul.f32 %v418, %v418
    %v427 = vadd.f32 %v419, %v420
    %v428 = vadd.f32 %v427, %v421
    %v429 = vadd.f32 %v428, %v422
    %430 = vadd.xlane.f32.xlu0 %v429
    %v431 = vpop.xlane.xlu0 %430
    %v432 = vadd.f32 %v423, %v424
    %v433 = vadd.f32 %v432, %v425
    %v434 = vadd.f32 %v433, %v426
    %435 = vadd.xlane.f32.xlu0 %v434
    %v436 = vpop.xlane.xlu0 %435
    %v437 = vmul.f32 %v431, 0.001953125
    %v438 = vmul.f32 %v436, 0.001953125
    %v439 = vadd.f32 %v437, 1e-05
    %v440 = vadd.f32 %v438, 1e-05
    %v441 = vrsqrt.pop %v439
    %v442 = vrsqrt.pop %v440
    %v443 = vmul.f32 %v411, %v441
    %v444 = vmul.f32 %v412, %v441
    %v445 = vmul.f32 %v413, %v441
    %v446 = vmul.f32 %v414, %v441
    %v447 = vmul.f32 %v415, %v442
    %v448 = vmul.f32 %v416, %v442
    %v449 = vmul.f32 %v417, %v442
    %v450 = vmul.f32 %v418, %v442
    %v451 = vpack.c.bf16 %v447, %v443
    %v452 = vpack.c.bf16 %v448, %v444
    %v453 = vpack.c.bf16 %v449, %v445
    %v454 = vpack.c.bf16 %v450, %v446
    %v456 = vlaneseq
    %v457 = vshrl.u32 %v456, 7
    %v458 = vsub.s32 0, %v457
    %v459 = vrot.slane %v91, %v458
    %v460 = vlaneseq
    %v461 = vshrl.u32 %v460, 7
    %v462 = vsub.s32 1, %v461
    %v463 = vrot.slane %v91, %v462
    %v464 = vlaneseq
    %v465 = vshrl.u32 %v464, 7
    %v466 = vsub.s32 2, %v465
    %v467 = vrot.slane %v91, %v466
    %v468 = vlaneseq
    %v469 = vshrl.u32 %v468, 7
    %v470 = vsub.s32 3, %v469
    %v471 = vrot.slane %v91, %v470
    %v476 = vpack.c.bf16 %v459, %v459
    %v477 = vpack.c.bf16 %v463, %v463
    %v478 = vpack.c.bf16 %v467, %v467
    %v479 = vpack.c.bf16 %v471, %v471
    %v481 = vpack.i.b16 %v476, %v476
    %v483 = vlaneseq
    %v484 = vshrl.u32 %v483, 7
    %v485 = vsub.s32 0, %v484
    %v486 = vrot.slane %v481, %v485
    %v488 = vpack.i.b16 %v477, %v477
    %v490 = vlaneseq
    %v491 = vshrl.u32 %v490, 7
    %v492 = vsub.s32 0, %v491
    %v493 = vrot.slane %v488, %v492
    %v495 = vpack.i.b16 %v478, %v478
    %v497 = vlaneseq
    %v498 = vshrl.u32 %v497, 7
    %v499 = vsub.s32 0, %v498
    %v500 = vrot.slane %v495, %v499
    %v502 = vpack.i.b16 %v479, %v479
    %v504 = vlaneseq
    %v505 = vshrl.u32 %v504, 7
    %v506 = vsub.s32 0, %v505
    %v507 = vrot.slane %v502, %v506
    %v508 = vmul.bf16 %v451, %v486
    %v509 = vmul.bf16 %v452, %v493
    %v510 = vmul.bf16 %v453, %v500
    %v511 = vmul.bf16 %v454, %v507
    %v513 = vlaneseq
    %v514 = vshrl.u32 %v513, 7
    %v515 = vsub.s32 0, %v514
    %v516 = vrot.slane %v93, %v515
    %v517 = vlaneseq
    %v518 = vshrl.u32 %v517, 7
    %v519 = vsub.s32 1, %v518
    %v520 = vrot.slane %v93, %v519
    %v521 = vlaneseq
    %v522 = vshrl.u32 %v521, 7
    %v523 = vsub.s32 2, %v522
    %v524 = vrot.slane %v93, %v523
    %v525 = vlaneseq
    %v526 = vshrl.u32 %v525, 7
    %v527 = vsub.s32 3, %v526
    %v528 = vrot.slane %v93, %v527
    %v533 = vpack.c.bf16 %v516, %v516
    %v534 = vpack.c.bf16 %v520, %v520
    %v535 = vpack.c.bf16 %v524, %v524
    %v536 = vpack.c.bf16 %v528, %v528
    %v538 = vpack.i.b16 %v533, %v533
    %v540 = vlaneseq
    %v541 = vshrl.u32 %v540, 7
    %v542 = vsub.s32 0, %v541
    %v543 = vrot.slane %v538, %v542
    %v545 = vpack.i.b16 %v534, %v534
    %v547 = vlaneseq
    %v548 = vshrl.u32 %v547, 7
    %v549 = vsub.s32 0, %v548
    %v550 = vrot.slane %v545, %v549
    %v552 = vpack.i.b16 %v535, %v535
    %v554 = vlaneseq
    %v555 = vshrl.u32 %v554, 7
    %v556 = vsub.s32 0, %v555
    %v557 = vrot.slane %v552, %v556
    %v559 = vpack.i.b16 %v536, %v536
    %v561 = vlaneseq
    %v562 = vshrl.u32 %v561, 7
    %v563 = vsub.s32 0, %v562
    %v564 = vrot.slane %v559, %v563
    %v565 = vadd.bf16 %v508, %v543
    %v566 = vadd.bf16 %v509, %v550
    %v567 = vadd.bf16 %v510, %v557
    %v568 = vadd.bf16 %v511, %v564
    %v569 = vmax.bf16 %v565, 0
    %v570 = vmax.bf16 %v566, 0
    %v571 = vmax.bf16 %v567, 0
    %v572 = vmax.bf16 %v568, 0
    %s573 = scalar_lea.vmem [#allocation8], 3
    %v574 = vld [vmem:[%s573] ss:$8 sm:$0x7]
    %s575 = scalar_lea.vmem [#allocation8], 4
    %v576 = vld [vmem:[%s575] ss:$8 sm:$0x7]
    %s577 = scalar_lea.vmem [#allocation8], 5
    %v578 = vld [vmem:[%s577] ss:$8 sm:$0x7]
    %v579 = vld [vmem:[#allocation5] sm:$0xff]
    %v580 = vld [vmem:[#allocation5 + $0x8] sm:$0xf]
    %v581 = vld [vmem:[#allocation5 + $0xc] sm:$0xff]
    %v582 = vld [vmem:[#allocation5 + $0x14] sm:$0xf]
    %v583 = vld [vmem:[#allocation5 + $0x18] sm:$0xff]
    %v584 = vld [vmem:[#allocation5 + $0x20] sm:$0xf]
    %v585 = vld [vmem:[#allocation5 + $0x24] sm:$0xff]
    %v586 = vld [vmem:[#allocation5 + $0x2c] sm:$0xf]
    %v587 = vld [vmem:[#allocation5 + $0x30] sm:$0xff]
    %v588 = vld [vmem:[#allocation5 + $0x38] sm:$0xf]
    %v589 = vld [vmem:[#allocation5 + $0x3c] sm:$0xff]
    %v590 = vld [vmem:[#allocation5 + $0x44] sm:$0xf]
    %v591 = vld [vmem:[#allocation5 + $0x48] sm:$0xff]
    %v592 = vld [vmem:[#allocation5 + $0x50] sm:$0xf]
    %v593 = vld [vmem:[#allocation5 + $0x54] sm:$0xff]
    %v594 = vld [vmem:[#allocation5 + $0x5c] sm:$0xf]
    %v595 = vld [vmem:[#allocation5 + $0x60] sm:$0xff]
    %v596 = vld [vmem:[#allocation5 + $0x68] sm:$0xf]
    %v597 = vld [vmem:[#allocation5 + $0x6c] sm:$0xff]
    %v598 = vld [vmem:[#allocation5 + $0x74] sm:$0xf]
    %v599 = vld [vmem:[#allocation5 + $0x78] sm:$0xff]
    %v600 = vld [vmem:[#allocation5 + $0x80] sm:$0xf]
    %v601 = vld [vmem:[#allocation5 + $0x84] sm:$0xff]
    %v602 = vld [vmem:[#allocation5 + $0x8c] sm:$0xf]
    %v603 = vld [vmem:[#allocation5 + $0x90] sm:$0xff]
    %v604 = vld [vmem:[#allocation5 + $0x98] sm:$0xf]
    %v605 = vld [vmem:[#allocation5 + $0x9c] sm:$0xff]
    %v606 = vld [vmem:[#allocation5 + $0xa4] sm:$0xf]
    %v607 = vld [vmem:[#allocation5 + $0xa8] sm:$0xff]
    %v608 = vld [vmem:[#allocation5 + $0xb0] sm:$0xf]
    %v609 = vld [vmem:[#allocation5 + $0xb4] sm:$0xff]
    %v610 = vld [vmem:[#allocation5 + $0xbc] sm:$0xf]
    %v611 = vld [vmem:[#allocation5 + $0xc0] sm:$0xff]
    %v612 = vld [vmem:[#allocation5 + $0xc8] sm:$0xf]
    %v613 = vld [vmem:[#allocation5 + $0xcc] sm:$0xff]
    %v614 = vld [vmem:[#allocation5 + $0xd4] sm:$0xf]
    %v615 = vld [vmem:[#allocation5 + $0xd8] sm:$0xff]
    %v616 = vld [vmem:[#allocation5 + $0xe0] sm:$0xf]
    %v617 = vld [vmem:[#allocation5 + $0xe4] sm:$0xff]
    %v618 = vld [vmem:[#allocation5 + $0xec] sm:$0xf]
    %v619 = vld [vmem:[#allocation5 + $0xf0] sm:$0xff]
    %v620 = vld [vmem:[#allocation5 + $0xf8] sm:$0xf]
    %v621 = vld [vmem:[#allocation5 + $0xfc] sm:$0xff]
    %v622 = vld [vmem:[#allocation5 + $0x104] sm:$0xf]
    %v623 = vld [vmem:[#allocation5 + $0x108] sm:$0xff]
    %v624 = vld [vmem:[#allocation5 + $0x110] sm:$0xf]
    %v625 = vld [vmem:[#allocation5 + $0x114] sm:$0xff]
    %v626 = vld [vmem:[#allocation5 + $0x11c] sm:$0xf]
    %v627 = vld [vmem:[#allocation5 + $0x120] sm:$0xff]
    %v628 = vld [vmem:[#allocation5 + $0x128] sm:$0xf]
    %v629 = vld [vmem:[#allocation5 + $0x12c] sm:$0xff]
    %v630 = vld [vmem:[#allocation5 + $0x134] sm:$0xf]
    %v631 = vld [vmem:[#allocation5 + $0x138] sm:$0xff]
    %v632 = vld [vmem:[#allocation5 + $0x140] sm:$0xf]
    %v633 = vld [vmem:[#allocation5 + $0x144] sm:$0xff]
    %v634 = vld [vmem:[#allocation5 + $0x14c] sm:$0xf]
    %v635 = vld [vmem:[#allocation5 + $0x150] sm:$0xff]
    %v636 = vld [vmem:[#allocation5 + $0x158] sm:$0xf]
    %v637 = vld [vmem:[#allocation5 + $0x15c] sm:$0xff]
    %v638 = vld [vmem:[#allocation5 + $0x164] sm:$0xf]
    %v639 = vld [vmem:[#allocation5 + $0x168] sm:$0xff]
    %v640 = vld [vmem:[#allocation5 + $0x170] sm:$0xf]
    %v641 = vld [vmem:[#allocation5 + $0x174] sm:$0xff]
    %v642 = vld [vmem:[#allocation5 + $0x17c] sm:$0xf]
    %v643 = vld [vmem:[#allocation5 + $0x180] sm:$0xff]
    %v644 = vld [vmem:[#allocation5 + $0x188] sm:$0xf]
    %v645 = vld [vmem:[#allocation5 + $0x18c] sm:$0xff]
    %v646 = vld [vmem:[#allocation5 + $0x194] sm:$0xf]
    %v647 = vld [vmem:[#allocation5 + $0x198] sm:$0xff]
    %v648 = vld [vmem:[#allocation5 + $0x1a0] sm:$0xf]
    %v649 = vld [vmem:[#allocation5 + $0x1a4] sm:$0xff]
    %v650 = vld [vmem:[#allocation5 + $0x1ac] sm:$0xf]
    %v651 = vld [vmem:[#allocation5 + $0x1b0] sm:$0xff]
    %v652 = vld [vmem:[#allocation5 + $0x1b8] sm:$0xf]
    %v653 = vld [vmem:[#allocation5 + $0x1bc] sm:$0xff]
    %v654 = vld [vmem:[#allocation5 + $0x1c4] sm:$0xf]
    %v655 = vld [vmem:[#allocation5 + $0x1c8] sm:$0xff]
    %v656 = vld [vmem:[#allocation5 + $0x1d0] sm:$0xf]
    %v657 = vld [vmem:[#allocation5 + $0x1d4] sm:$0xff]
    %v658 = vld [vmem:[#allocation5 + $0x1dc] sm:$0xf]
    %v659 = vld [vmem:[#allocation5 + $0x1e0] sm:$0xff]
    %v660 = vld [vmem:[#allocation5 + $0x1e8] sm:$0xf]
    %v661 = vld [vmem:[#allocation5 + $0x1ec] sm:$0xff]
    %v662 = vld [vmem:[#allocation5 + $0x1f4] sm:$0xf]
    %v663 = vld [vmem:[#allocation5 + $0x1f8] sm:$0xff]
    %v664 = vld [vmem:[#allocation5 + $0x200] sm:$0xf]
    %v665 = vld [vmem:[#allocation5 + $0x204] sm:$0xff]
    %v666 = vld [vmem:[#allocation5 + $0x20c] sm:$0xf]
    %v667 = vld [vmem:[#allocation5 + $0x210] sm:$0xff]
    %v668 = vld [vmem:[#allocation5 + $0x218] sm:$0xf]
    %v669 = vld [vmem:[#allocation5 + $0x21c] sm:$0xff]
    %v670 = vld [vmem:[#allocation5 + $0x224] sm:$0xf]
    %v671 = vld [vmem:[#allocation5 + $0x228] sm:$0xff]
    %v672 = vld [vmem:[#allocation5 + $0x230] sm:$0xf]
    %v673 = vld [vmem:[#allocation5 + $0x234] sm:$0xff]
    %v674 = vld [vmem:[#allocation5 + $0x23c] sm:$0xf]
    %v675 = vld [vmem:[#allocation5 + $0x240] sm:$0xff]
    %v676 = vld [vmem:[#allocation5 + $0x248] sm:$0xf]
    %v677 = vld [vmem:[#allocation5 + $0x24c] sm:$0xff]
    %v678 = vld [vmem:[#allocation5 + $0x254] sm:$0xf]
    %v679 = vld [vmem:[#allocation5 + $0x258] sm:$0xff]
    %v680 = vld [vmem:[#allocation5 + $0x260] sm:$0xf]
    %v681 = vld [vmem:[#allocation5 + $0x264] sm:$0xff]
    %v682 = vld [vmem:[#allocation5 + $0x26c] sm:$0xf]
    %v683 = vld [vmem:[#allocation5 + $0x270] sm:$0xff]
    %v684 = vld [vmem:[#allocation5 + $0x278] sm:$0xf]
    %v685 = vld [vmem:[#allocation5 + $0x27c] sm:$0xff]
    %v686 = vld [vmem:[#allocation5 + $0x284] sm:$0xf]
    %v687 = vld [vmem:[#allocation5 + $0x288] sm:$0xff]
    %v688 = vld [vmem:[#allocation5 + $0x290] sm:$0xf]
    %v689 = vld [vmem:[#allocation5 + $0x294] sm:$0xff]
    %v690 = vld [vmem:[#allocation5 + $0x29c] sm:$0xf]
    %v691 = vld [vmem:[#allocation5 + $0x2a0] sm:$0xff]
    %v692 = vld [vmem:[#allocation5 + $0x2a8] sm:$0xf]
    %v693 = vld [vmem:[#allocation5 + $0x2ac] sm:$0xff]
    %v694 = vld [vmem:[#allocation5 + $0x2b4] sm:$0xf]
    %v695 = vld [vmem:[#allocation5 + $0x2b8] sm:$0xff]
    %v696 = vld [vmem:[#allocation5 + $0x2c0] sm:$0xf]
    %v697 = vld [vmem:[#allocation5 + $0x2c4] sm:$0xff]
    %v698 = vld [vmem:[#allocation5 + $0x2cc] sm:$0xf]
    %v699 = vld [vmem:[#allocation5 + $0x2d0] sm:$0xff]
    %v700 = vld [vmem:[#allocation5 + $0x2d8] sm:$0xf]
    %v701 = vld [vmem:[#allocation5 + $0x2dc] sm:$0xff]
    %v702 = vld [vmem:[#allocation5 + $0x2e4] sm:$0xf]
    %v703 = vld [vmem:[#allocation5 + $0x2e8] sm:$0xff]
    %v704 = vld [vmem:[#allocation5 + $0x2f0] sm:$0xf]
    %v705 = vld [vmem:[#allocation5 + $0x2f4] sm:$0xff]
    %v706 = vld [vmem:[#allocation5 + $0x2fc] sm:$0xf]
    %v708 = vlaneseq
    %v709 = vshrl.u32 %v708, 7
    %v710 = vsub.s32 0, %v709
    %v711 = vrot.slane %v574, %v710
    %v712 = vlaneseq
    %v713 = vshrl.u32 %v712, 7
    %v714 = vsub.s32 1, %v713
    %v715 = vrot.slane %v574, %v714
    %v716 = vlaneseq
    %v717 = vshrl.u32 %v716, 7
    %v718 = vsub.s32 2, %v717
    %v719 = vrot.slane %v574, %v718
    %v851 = vunpack.c.l.b16 %v579
    %v852 = vunpack.c.h.b16 %v579
    %v853 = vunpack.c.l.b16 %v580
    %v854 = vunpack.c.l.b16 %v581
    %v855 = vunpack.c.h.b16 %v581
    %v856 = vunpack.c.l.b16 %v582
    %v857 = vunpack.c.l.b16 %v583
    %v858 = vunpack.c.h.b16 %v583
    %v859 = vunpack.c.l.b16 %v584
    %v860 = vunpack.c.l.b16 %v585
    %v861 = vunpack.c.h.b16 %v585
    %v862 = vunpack.c.l.b16 %v586
    %v863 = vunpack.c.l.b16 %v587
    %v864 = vunpack.c.h.b16 %v587
    %v865 = vunpack.c.l.b16 %v588
    %v866 = vunpack.c.l.b16 %v589
    %v867 = vunpack.c.h.b16 %v589
    %v868 = vunpack.c.l.b16 %v590
    %v869 = vunpack.c.l.b16 %v591
    %v870 = vunpack.c.h.b16 %v591
    %v871 = vunpack.c.l.b16 %v592
    %v872 = vunpack.c.l.b16 %v593
    %v873 = vunpack.c.h.b16 %v593
    %v874 = vunpack.c.l.b16 %v594
    %v875 = vunpack.c.l.b16 %v595
    %v876 = vunpack.c.h.b16 %v595
    %v877 = vunpack.c.l.b16 %v596
    %v878 = vunpack.c.l.b16 %v597
    %v879 = vunpack.c.h.b16 %v597
    %v880 = vunpack.c.l.b16 %v598
    %v881 = vunpack.c.l.b16 %v599
    %v882 = vunpack.c.h.b16 %v599
    %v883 = vunpack.c.l.b16 %v600
    %v884 = vunpack.c.l.b16 %v601
    %v885 = vunpack.c.h.b16 %v601
    %v886 = vunpack.c.l.b16 %v602
    %v887 = vunpack.c.l.b16 %v603
    %v888 = vunpack.c.h.b16 %v603
    %v889 = vunpack.c.l.b16 %v604
    %v890 = vunpack.c.l.b16 %v605
    %v891 = vunpack.c.h.b16 %v605
    %v892 = vunpack.c.l.b16 %v606
    %v893 = vunpack.c.l.b16 %v607
    %v894 = vunpack.c.h.b16 %v607
    %v895 = vunpack.c.l.b16 %v608
    %v896 = vunpack.c.l.b16 %v609
    %v897 = vunpack.c.h.b16 %v609
    %v898 = vunpack.c.l.b16 %v610
    %v899 = vunpack.c.l.b16 %v611
    %v900 = vunpack.c.h.b16 %v611
    %v901 = vunpack.c.l.b16 %v612
    %v902 = vunpack.c.l.b16 %v613
    %v903 = vunpack.c.h.b16 %v613
    %v904 = vunpack.c.l.b16 %v614
    %v905 = vunpack.c.l.b16 %v615
    %v906 = vunpack.c.h.b16 %v615
    %v907 = vunpack.c.l.b16 %v616
    %v908 = vunpack.c.l.b16 %v617
    %v909 = vunpack.c.h.b16 %v617
    %v910 = vunpack.c.l.b16 %v618
    %v911 = vunpack.c.l.b16 %v619
    %v912 = vunpack.c.h.b16 %v619
    %v913 = vunpack.c.l.b16 %v620
    %v914 = vunpack.c.l.b16 %v621
    %v915 = vunpack.c.h.b16 %v621
    %v916 = vunpack.c.l.b16 %v622
    %v917 = vunpack.c.l.b16 %v623
    %v918 = vunpack.c.h.b16 %v623
    %v919 = vunpack.c.l.b16 %v624
    %v920 = vunpack.c.l.b16 %v625
    %v921 = vunpack.c.h.b16 %v625
    %v922 = vunpack.c.l.b16 %v626
    %v923 = vunpack.c.l.b16 %v627
    %v924 = vunpack.c.h.b16 %v627
    %v925 = vunpack.c.l.b16 %v628
    %v926 = vunpack.c.l.b16 %v629
    %v927 = vunpack.c.h.b16 %v629
    %v928 = vunpack.c.l.b16 %v630
    %v929 = vunpack.c.l.b16 %v631
    %v930 = vunpack.c.h.b16 %v631
    %v931 = vunpack.c.l.b16 %v632
    %v932 = vunpack.c.l.b16 %v633
    %v933 = vunpack.c.h.b16 %v633
    %v934 = vunpack.c.l.b16 %v634
    %v935 = vunpack.c.l.b16 %v635
    %v936 = vunpack.c.h.b16 %v635
    %v937 = vunpack.c.l.b16 %v636
    %v938 = vunpack.c.l.b16 %v637
    %v939 = vunpack.c.h.b16 %v637
    %v940 = vunpack.c.l.b16 %v638
    %v941 = vunpack.c.l.b16 %v639
    %v942 = vunpack.c.h.b16 %v639
    %v943 = vunpack.c.l.b16 %v640
    %v944 = vunpack.c.l.b16 %v641
    %v945 = vunpack.c.h.b16 %v641
    %v946 = vunpack.c.l.b16 %v642
    %v947 = vunpack.c.l.b16 %v643
    %v948 = vunpack.c.h.b16 %v643
    %v949 = vunpack.c.l.b16 %v644
    %v950 = vunpack.c.l.b16 %v645
    %v951 = vunpack.c.h.b16 %v645
    %v952 = vunpack.c.l.b16 %v646
    %v953 = vunpack.c.l.b16 %v647
    %v954 = vunpack.c.h.b16 %v647
    %v955 = vunpack.c.l.b16 %v648
    %v956 = vunpack.c.l.b16 %v649
    %v957 = vunpack.c.h.b16 %v649
    %v958 = vunpack.c.l.b16 %v650
    %v959 = vunpack.c.l.b16 %v651
    %v960 = vunpack.c.h.b16 %v651
    %v961 = vunpack.c.l.b16 %v652
    %v962 = vunpack.c.l.b16 %v653
    %v963 = vunpack.c.h.b16 %v653
    %v964 = vunpack.c.l.b16 %v654
    %v965 = vunpack.c.l.b16 %v655
    %v966 = vunpack.c.h.b16 %v655
    %v967 = vunpack.c.l.b16 %v656
    %v968 = vunpack.c.l.b16 %v657
    %v969 = vunpack.c.h.b16 %v657
    %v970 = vunpack.c.l.b16 %v658
    %v971 = vunpack.c.l.b16 %v659
    %v972 = vunpack.c.h.b16 %v659
    %v973 = vunpack.c.l.b16 %v660
    %v974 = vunpack.c.l.b16 %v661
    %v975 = vunpack.c.h.b16 %v661
    %v976 = vunpack.c.l.b16 %v662
    %v977 = vunpack.c.l.b16 %v663
    %v978 = vunpack.c.h.b16 %v663
    %v979 = vunpack.c.l.b16 %v664
    %v980 = vunpack.c.l.b16 %v665
    %v981 = vunpack.c.h.b16 %v665
    %v982 = vunpack.c.l.b16 %v666
    %v983 = vunpack.c.l.b16 %v667
    %v984 = vunpack.c.h.b16 %v667
    %v985 = vunpack.c.l.b16 %v668
    %v986 = vunpack.c.l.b16 %v669
    %v987 = vunpack.c.h.b16 %v669
    %v988 = vunpack.c.l.b16 %v670
    %v989 = vunpack.c.l.b16 %v671
    %v990 = vunpack.c.h.b16 %v671
    %v991 = vunpack.c.l.b16 %v672
    %v992 = vunpack.c.l.b16 %v673
    %v993 = vunpack.c.h.b16 %v673
    %v994 = vunpack.c.l.b16 %v674
    %v995 = vunpack.c.l.b16 %v675
    %v996 = vunpack.c.h.b16 %v675
    %v997 = vunpack.c.l.b16 %v676
    %v998 = vunpack.c.l.b16 %v677
    %v999 = vunpack.c.h.b16 %v677
    %v1000 = vunpack.c.l.b16 %v678
    %v1001 = vunpack.c.l.b16 %v679
    %v1002 = vunpack.c.h.b16 %v679
    %v1003 = vunpack.c.l.b16 %v680
    %v1004 = vunpack.c.l.b16 %v681
    %v1005 = vunpack.c.h.b16 %v681
    %v1006 = vunpack.c.l.b16 %v682
    %v1007 = vunpack.c.l.b16 %v683
    %v1008 = vunpack.c.h.b16 %v683
    %v1009 = vunpack.c.l.b16 %v684
    %v1010 = vunpack.c.l.b16 %v685
    %v1011 = vunpack.c.h.b16 %v685
    %v1012 = vunpack.c.l.b16 %v686
    %v1013 = vunpack.c.l.b16 %v687
    %v1014 = vunpack.c.h.b16 %v687
    %v1015 = vunpack.c.l.b16 %v688
    %v1016 = vunpack.c.l.b16 %v689
    %v1017 = vunpack.c.h.b16 %v689
    %v1018 = vunpack.c.l.b16 %v690
    %v1019 = vunpack.c.l.b16 %v691
    %v1020 = vunpack.c.h.b16 %v691
    %v1021 = vunpack.c.l.b16 %v692
    %v1022 = vunpack.c.l.b16 %v693
    %v1023 = vunpack.c.h.b16 %v693
    %v1024 = vunpack.c.l.b16 %v694
    %v1025 = vunpack.c.l.b16 %v695
    %v1026 = vunpack.c.h.b16 %v695
    %v1027 = vunpack.c.l.b16 %v696
    %v1028 = vunpack.c.l.b16 %v697
    %v1029 = vunpack.c.h.b16 %v697
    %v1030 = vunpack.c.l.b16 %v698
    %v1031 = vunpack.c.l.b16 %v699
    %v1032 = vunpack.c.h.b16 %v699
    %v1033 = vunpack.c.l.b16 %v700
    %v1034 = vunpack.c.l.b16 %v701
    %v1035 = vunpack.c.h.b16 %v701
    %v1036 = vunpack.c.l.b16 %v702
    %v1037 = vunpack.c.l.b16 %v703
    %v1038 = vunpack.c.h.b16 %v703
    %v1039 = vunpack.c.l.b16 %v704
    %v1040 = vunpack.c.l.b16 %v705
    %v1041 = vunpack.c.h.b16 %v705
    %v1042 = vunpack.c.l.b16 %v706
    %v1043 = vpack.c.b16 %v854, %v851
    %v1044 = vpack.c.b16 %v855, %v852
    %v1045 = vpack.c.b16 %v856, %v853
    %v1046 = vpack.c.b16 %v860, %v857
    %v1047 = vpack.c.b16 %v861, %v858
    %v1048 = vpack.c.b16 %v862, %v859
    %v1049 = vpack.c.b16 %v866, %v863
    %v1050 = vpack.c.b16 %v867, %v864
    %v1051 = vpack.c.b16 %v868, %v865
    %v1052 = vpack.c.b16 %v872, %v869
    %v1053 = vpack.c.b16 %v873, %v870
    %v1054 = vpack.c.b16 %v874, %v871
    %v1055 = vpack.c.b16 %v878, %v875
    %v1056 = vpack.c.b16 %v879, %v876
    %v1057 = vpack.c.b16 %v880, %v877
    %v1058 = vpack.c.b16 %v884, %v881
    %v1059 = vpack.c.b16 %v885, %v882
    %v1060 = vpack.c.b16 %v886, %v883
    %v1061 = vpack.c.b16 %v890, %v887
    %v1062 = vpack.c.b16 %v891, %v888
    %v1063 = vpack.c.b16 %v892, %v889
    %v1064 = vpack.c.b16 %v896, %v893
    %v1065 = vpack.c.b16 %v897, %v894
    %v1066 = vpack.c.b16 %v898, %v895
    %v1067 = vpack.c.b16 %v902, %v899
    %v1068 = vpack.c.b16 %v903, %v900
    %v1069 = vpack.c.b16 %v904, %v901
    %v1070 = vpack.c.b16 %v908, %v905
    %v1071 = vpack.c.b16 %v909, %v906
    %v1072 = vpack.c.b16 %v910, %v907
    %v1073 = vpack.c.b16 %v914, %v911
    %v1074 = vpack.c.b16 %v915, %v912
    %v1075 = vpack.c.b16 %v916, %v913
    %v1076 = vpack.c.b16 %v920, %v917
    %v1077 = vpack.c.b16 %v921, %v918
    %v1078 = vpack.c.b16 %v922, %v919
    %v1079 = vpack.c.b16 %v926, %v923
    %v1080 = vpack.c.b16 %v927, %v924
    %v1081 = vpack.c.b16 %v928, %v925
    %v1082 = vpack.c.b16 %v932, %v929
    %v1083 = vpack.c.b16 %v933, %v930
    %v1084 = vpack.c.b16 %v934, %v931
    %v1085 = vpack.c.b16 %v938, %v935
    %v1086 = vpack.c.b16 %v939, %v936
    %v1087 = vpack.c.b16 %v940, %v937
    %v1088 = vpack.c.b16 %v944, %v941
    %v1089 = vpack.c.b16 %v945, %v942
    %v1090 = vpack.c.b16 %v946, %v943
    %v1091 = vpack.c.b16 %v950, %v947
    %v1092 = vpack.c.b16 %v951, %v948
    %v1093 = vpack.c.b16 %v952, %v949
    %v1094 = vpack.c.b16 %v956, %v953
    %v1095 = vpack.c.b16 %v957, %v954
    %v1096 = vpack.c.b16 %v958, %v955
    %v1097 = vpack.c.b16 %v962, %v959
    %v1098 = vpack.c.b16 %v963, %v960
    %v1099 = vpack.c.b16 %v964, %v961
    %v1100 = vpack.c.b16 %v968, %v965
    %v1101 = vpack.c.b16 %v969, %v966
    %v1102 = vpack.c.b16 %v970, %v967
    %v1103 = vpack.c.b16 %v974, %v971
    %v1104 = vpack.c.b16 %v975, %v972
    %v1105 = vpack.c.b16 %v976, %v973
    %v1106 = vpack.c.b16 %v980, %v977
    %v1107 = vpack.c.b16 %v981, %v978
    %v1108 = vpack.c.b16 %v982, %v979
    %v1109 = vpack.c.b16 %v986, %v983
    %v1110 = vpack.c.b16 %v987, %v984
    %v1111 = vpack.c.b16 %v988, %v985
    %v1112 = vpack.c.b16 %v992, %v989
    %v1113 = vpack.c.b16 %v993, %v990
    %v1114 = vpack.c.b16 %v994, %v991
    %v1115 = vpack.c.b16 %v998, %v995
    %v1116 = vpack.c.b16 %v999, %v996
    %v1117 = vpack.c.b16 %v1000, %v997
    %v1118 = vpack.c.b16 %v1004, %v1001
    %v1119 = vpack.c.b16 %v1005, %v1002
    %v1120 = vpack.c.b16 %v1006, %v1003
    %v1121 = vpack.c.b16 %v1010, %v1007
    %v1122 = vpack.c.b16 %v1011, %v1008
    %v1123 = vpack.c.b16 %v1012, %v1009
    %v1124 = vpack.c.b16 %v1016, %v1013
    %v1125 = vpack.c.b16 %v1017, %v1014
    %v1126 = vpack.c.b16 %v1018, %v1015
    %v1127 = vpack.c.b16 %v1022, %v1019
    %v1128 = vpack.c.b16 %v1023, %v1020
    %v1129 = vpack.c.b16 %v1024, %v1021
    %v1130 = vpack.c.b16 %v1028, %v1025
    %v1131 = vpack.c.b16 %v1029, %v1026
    %v1132 = vpack.c.b16 %v1030, %v1027
    %v1133 = vpack.c.b16 %v1034, %v1031
    %v1134 = vpack.c.b16 %v1035, %v1032
    %v1135 = vpack.c.b16 %v1036, %v1033
    %v1136 = vpack.c.b16 %v1040, %v1037
    %v1137 = vpack.c.b16 %v1041, %v1038
    %v1138 = vpack.c.b16 %v1042, %v1039
    %1235 = vmatprep.subr.bf16.mxu0 %v1044
    %1236 = vmatpush1.bf16.msra.mxu0 %v1043
    %1237 = vmatprep.subr.bf16.mxu0 %v1047
    %1238 = vmatpush1.bf16.msra.mxu0 %v1046
    %1239 = vmatprep.subr.bf16.mxu0 %v1050
    %1240 = vmatpush1.bf16.msra.mxu0 %v1049
    %1241 = vmatprep.subr.bf16.mxu0 %v1053
    %1242 = vmatpush1.bf16.msra.mxu0 %v1052
    %1243 = vmatprep.subr.bf16.mxu0 %v1056
    %1244 = vmatpush1.bf16.msra.mxu0 %v1055
    %1245 = vmatprep.subr.bf16.mxu0 %v1059
    %1246 = vmatpush1.bf16.msra.mxu0 %v1058
    %1247 = vmatprep.subr.bf16.mxu0 %v1062
    %1248 = vmatpush1.bf16.msra.mxu0 %v1061
    %1249 = vmatprep.subr.bf16.mxu0 %v1065
    %1250 = vmatpush1.bf16.msra.mxu0 %v1064
    %1251 = vmatprep.subr.bf16.mxu0 %v1068
    %1252 = vmatpush1.bf16.msra.mxu0 %v1067
    %1253 = vmatprep.subr.bf16.mxu0 %v1071
    %1254 = vmatpush1.bf16.msra.mxu0 %v1070
    %1255 = vmatprep.subr.bf16.mxu0 %v1074
    %1256 = vmatpush1.bf16.msra.mxu0 %v1073
    %1257 = vmatprep.subr.bf16.mxu0 %v1077
    %1258 = vmatpush1.bf16.msra.mxu0 %v1076
    %1259 = vmatprep.subr.bf16.mxu0 %v1080
    %1260 = vmatpush1.bf16.msra.mxu0 %v1079
    %1261 = vmatprep.subr.bf16.mxu0 %v1083
    %1262 = vmatpush1.bf16.msra.mxu0 %v1082
    %1263 = vmatprep.subr.bf16.mxu0 %v1086
    %1264 = vmatpush1.bf16.msra.mxu0 %v1085
    %1265 = vmatprep.subr.bf16.mxu0 %v1089
    %1266 = vmatpush1.bf16.msra.mxu0 %v1088
    %1267 = vmatprep.mubr.bf16.mxu0 %v570
    %1268 = vmatmul.mubr.bf16.gmra.mrb[0].mxu0 %v569
    %v1269 = vpop.f32.mrb[0].mxu0
    %v1270 = vadd.f32 %v711, %v1269
    %v1271 = vpop.f32.mrb[0].mxu0
    %v1272 = vadd.f32 %v715, %v1271
    %v1273 = vpop.f32.mrb[0].mxu0
    %v1274 = vadd.f32 %v711, %v1273
    %v1275 = vpop.f32.mrb[0].mxu0
    %v1276 = vadd.f32 %v715, %v1275
    %1277 = vdwg.mxu0
    %1278 = vmatprep.subr.bf16.mxu0 %v1092
    %1279 = vmatpush1.bf16.msra.mxu0 %v1091
    %1280 = vmatprep.subr.bf16.mxu0 %v1095
    %1281 = vmatpush1.bf16.msra.mxu0 %v1094
    %1282 = vmatprep.subr.bf16.mxu0 %v1098
    %1283 = vmatpush1.bf16.msra.mxu0 %v1097
    %1284 = vmatprep.subr.bf16.mxu0 %v1101
    %1285 = vmatpush1.bf16.msra.mxu0 %v1100
    %1286 = vmatprep.subr.bf16.mxu0 %v1104
    %1287 = vmatpush1.bf16.msra.mxu0 %v1103
    %1288 = vmatprep.subr.bf16.mxu0 %v1107
    %1289 = vmatpush1.bf16.msra.mxu0 %v1106
    %1290 = vmatprep.subr.bf16.mxu0 %v1110
    %1291 = vmatpush1.bf16.msra.mxu0 %v1109
    %1292 = vmatprep.subr.bf16.mxu0 %v1113
    %1293 = vmatpush1.bf16.msra.mxu0 %v1112
    %1294 = vmatprep.subr.bf16.mxu0 %v1116
    %1295 = vmatpush1.bf16.msra.mxu0 %v1115
    %1296 = vmatprep.subr.bf16.mxu0 %v1119
    %1297 = vmatpush1.bf16.msra.mxu0 %v1118
    %1298 = vmatprep.subr.bf16.mxu0 %v1122
    %1299 = vmatpush1.bf16.msra.mxu0 %v1121
    %1300 = vmatprep.subr.bf16.mxu0 %v1125
    %1301 = vmatpush1.bf16.msra.mxu0 %v1124
    %1302 = vmatprep.subr.bf16.mxu0 %v1128
    %1303 = vmatpush1.bf16.msra.mxu0 %v1127
    %1304 = vmatprep.subr.bf16.mxu0 %v1131
    %1305 = vmatpush1.bf16.msra.mxu0 %v1130
    %1306 = vmatprep.subr.bf16.mxu0 %v1134
    %1307 = vmatpush1.bf16.msra.mxu0 %v1133
    %1308 = vmatprep.subr.bf16.mxu0 %v1137
    %1309 = vmatpush1.bf16.msra.mxu0 %v1136
    %1310 = vmatprep.mubr.bf16.mxu0 %v572
    %1311 = vmatmul.mubr.bf16.gmra.mrb[0].mxu0 %v571
    %v1312 = vpop.f32.mrb[0].mxu0
    %v1313 = vadd.f32 %v1270, %v1312
    %v1314 = vpop.f32.mrb[0].mxu0
    %v1315 = vadd.f32 %v1272, %v1314
    %v1316 = vpop.f32.mrb[0].mxu0
    %v1317 = vadd.f32 %v1274, %v1316
    %v1318 = vpop.f32.mrb[0].mxu0
    %v1319 = vadd.f32 %v1276, %v1318
    %1320 = vdwg.mxu0
    %1321 = vmatprep.subr.bf16.mxu0 0
    %1322 = vmatpush1.bf16.msra.mxu0 %v1045
    %1323 = vmatprep.subr.bf16.mxu0 0
    %1324 = vmatpush1.bf16.msra.mxu0 %v1048
    %1325 = vmatprep.subr.bf16.mxu0 0
    %1326 = vmatpush1.bf16.msra.mxu0 %v1051
    %1327 = vmatprep.subr.bf16.mxu0 0
    %1328 = vmatpush1.bf16.msra.mxu0 %v1054
    %1329 = vmatprep.subr.bf16.mxu0 0
    %1330 = vmatpush1.bf16.msra.mxu0 %v1057
    %1331 = vmatprep.subr.bf16.mxu0 0
    %1332 = vmatpush1.bf16.msra.mxu0 %v1060
    %1333 = vmatprep.subr.bf16.mxu0 0
    %1334 = vmatpush1.bf16.msra.mxu0 %v1063
    %1335 = vmatprep.subr.bf16.mxu0 0
    %1336 = vmatpush1.bf16.msra.mxu0 %v1066
    %1337 = vmatprep.subr.bf16.mxu0 0
    %1338 = vmatpush1.bf16.msra.mxu0 %v1069
    %1339 = vmatprep.subr.bf16.mxu0 0
    %1340 = vmatpush1.bf16.msra.mxu0 %v1072
    %1341 = vmatprep.subr.bf16.mxu0 0
    %1342 = vmatpush1.bf16.msra.mxu0 %v1075
    %1343 = vmatprep.subr.bf16.mxu0 0
    %1344 = vmatpush1.bf16.msra.mxu0 %v1078
    %1345 = vmatprep.subr.bf16.mxu0 0
    %1346 = vmatpush1.bf16.msra.mxu0 %v1081
    %1347 = vmatprep.subr.bf16.mxu0 0
    %1348 = vmatpush1.bf16.msra.mxu0 %v1084
    %1349 = vmatprep.subr.bf16.mxu0 0
    %1350 = vmatpush1.bf16.msra.mxu0 %v1087
    %1351 = vmatprep.subr.bf16.mxu0 0
    %1352 = vmatpush1.bf16.msra.mxu0 %v1090
    %1353 = vmatprep.mubr.bf16.mxu0 %v570
    %1354 = vmatmul.mubr.bf16.gmra.mrb[0].mxu0 %v569
    %v1355 = vpop.f32.mrb[0].mxu0
    %v1356 = vadd.f32 %v719, %v1355
    %v1357 = vpop.f32.mrb[0].mxu0
    %v1358 = vpop.f32.mrb[0].mxu0
    %v1359 = vadd.f32 %v719, %v1358
    %v1360 = vpop.f32.mrb[0].mxu0
    %1361 = vdwg.mxu0
    %1362 = vmatprep.subr.bf16.mxu0 0
    %1363 = vmatpush1.bf16.msra.mxu0 %v1093
    %1364 = vmatprep.subr.bf16.mxu0 0
    %1365 = vmatpush1.bf16.msra.mxu0 %v1096
    %1366 = vmatprep.subr.bf16.mxu0 0
    %1367 = vmatpush1.bf16.msra.mxu0 %v1099
    %1368 = vmatprep.subr.bf16.mxu0 0
    %1369 = vmatpush1.bf16.msra.mxu0 %v1102
    %1370 = vmatprep.subr.bf16.mxu0 0
    %1371 = vmatpush1.bf16.msra.mxu0 %v1105
    %1372 = vmatprep.subr.bf16.mxu0 0
    %1373 = vmatpush1.bf16.msra.mxu0 %v1108
    %1374 = vmatprep.subr.bf16.mxu0 0
    %1375 = vmatpush1.bf16.msra.mxu0 %v1111
    %1376 = vmatprep.subr.bf16.mxu0 0
    %1377 = vmatpush1.bf16.msra.mxu0 %v1114
    %1378 = vmatprep.subr.bf16.mxu0 0
    %1379 = vmatpush1.bf16.msra.mxu0 %v1117
    %1380 = vmatprep.subr.bf16.mxu0 0
    %1381 = vmatpush1.bf16.msra.mxu0 %v1120
    %1382 = vmatprep.subr.bf16.mxu0 0
    %1383 = vmatpush1.bf16.msra.mxu0 %v1123
    %1384 = vmatprep.subr.bf16.mxu0 0
    %1385 = vmatpush1.bf16.msra.mxu0 %v1126
    %1386 = vmatprep.subr.bf16.mxu0 0
    %1387 = vmatpush1.bf16.msra.mxu0 %v1129
    %1388 = vmatprep.subr.bf16.mxu0 0
    %1389 = vmatpush1.bf16.msra.mxu0 %v1132
    %1390 = vmatprep.subr.bf16.mxu0 0
    %1391 = vmatpush1.bf16.msra.mxu0 %v1135
    %1392 = vmatprep.subr.bf16.mxu0 0
    %1393 = vmatpush1.bf16.msra.mxu0 %v1138
    %1394 = vmatprep.mubr.bf16.mxu0 %v572
    %1395 = vmatmul.mubr.bf16.gmra.mrb[0].mxu0 %v571
    %v1396 = vpop.f32.mrb[0].mxu0
    %v1397 = vadd.f32 %v1356, %v1396
    %v1398 = vpop.f32.mrb[0].mxu0
    %v1399 = vpop.f32.mrb[0].mxu0
    %v1400 = vadd.f32 %v1359, %v1399
    %v1401 = vpop.f32.mrb[0].mxu0
    %1402 = vdwg.mxu0
    %v1403 = vadd.f32 %v1313, %v1315
    %v1404 = vadd.f32 %v1403, %v1397
    %1405 = vadd.xlane.f32.xlu0 %v1404
    %v1406 = vpop.xlane.xlu0 %1405
    %v1407 = vadd.f32 %v1317, %v1319
    %v1408 = vadd.f32 %v1407, %v1400
    %1409 = vadd.xlane.f32.xlu0 %v1408
    %v1410 = vpop.xlane.xlu0 %1409
    %v1411 = vmul.f32 %v1406, 0.0026041667
    %v1412 = vmul.f32 %v1410, 0.0026041667
    %v1413 = vsub.f32 %v1313, %v1411
    %v1414 = vsub.f32 %v1315, %v1411
    %v1415 = vsub.f32 %v1397, %v1411
    %v1416 = vsub.f32 %v1317, %v1412
    %v1417 = vsub.f32 %v1319, %v1412
    %v1418 = vsub.f32 %v1400, %v1412
    %v1419 = vmul.f32 %v1413, %v1413
    %v1420 = vmul.f32 %v1414, %v1414
    %v1421 = vmul.f32 %v1415, %v1415
    %v1422 = vmul.f32 %v1416, %v1416
    %v1423 = vmul.f32 %v1417, %v1417
    %v1424 = vmul.f32 %v1418, %v1418
    %v1425 = vadd.f32 %v1419, %v1420
    %v1426 = vadd.f32 %v1425, %v1421
    %1427 = vadd.xlane.f32.xlu0 %v1426
    %v1428 = vpop.xlane.xlu0 %1427
    %v1429 = vadd.f32 %v1422, %v1423
    %v1430 = vadd.f32 %v1429, %v1424
    %1431 = vadd.xlane.f32.xlu0 %v1430
    %v1432 = vpop.xlane.xlu0 %1431
    %v1433 = vmul.f32 %v1428, 0.0026041667
    %v1434 = vmul.f32 %v1432, 0.0026041667
    %v1435 = vadd.f32 %v1433, 1e-05
    %v1436 = vadd.f32 %v1434, 1e-05
    %v1437 = vrsqrt.pop %v1435
    %v1438 = vrsqrt.pop %v1436
    %v1439 = vmul.f32 %v1413, %v1437
    %v1440 = vmul.f32 %v1414, %v1437
    %v1441 = vmul.f32 %v1415, %v1437
    %v1442 = vmul.f32 %v1416, %v1438
    %v1443 = vmul.f32 %v1417, %v1438
    %v1444 = vmul.f32 %v1418, %v1438
    %v1445 = vpack.c.bf16 %v1442, %v1439
    %v1446 = vpack.c.bf16 %v1443, %v1440
    %v1447 = vpack.c.bf16 %v1444, %v1441
    %v1449 = vlaneseq
    %v1450 = vshrl.u32 %v1449, 7
    %v1451 = vsub.s32 0, %v1450
    %v1452 = vrot.slane %v576, %v1451
    %v1453 = vlaneseq
    %v1454 = vshrl.u32 %v1453, 7
    %v1455 = vsub.s32 1, %v1454
    %v1456 = vrot.slane %v576, %v1455
    %v1457 = vlaneseq
    %v1458 = vshrl.u32 %v1457, 7
    %v1459 = vsub.s32 2, %v1458
    %v1460 = vrot.slane %v576, %v1459
    %v1464 = vpack.c.bf16 %v1452, %v1452
    %v1465 = vpack.c.bf16 %v1456, %v1456
    %v1466 = vpack.c.bf16 %v1460, %v1460
    %v1468 = vpack.i.b16 %v1464, %v1464
    %v1470 = vlaneseq
    %v1471 = vshrl.u32 %v1470, 7
    %v1472 = vsub.s32 0, %v1471
    %v1473 = vrot.slane %v1468, %v1472
    %v1475 = vpack.i.b16 %v1465, %v1465
    %v1477 = vlaneseq
    %v1478 = vshrl.u32 %v1477, 7
    %v1479 = vsub.s32 0, %v1478
    %v1480 = vrot.slane %v1475, %v1479
    %v1482 = vpack.i.b16 %v1466, %v1466
    %v1484 = vlaneseq
    %v1485 = vshrl.u32 %v1484, 7
    %v1486 = vsub.s32 0, %v1485
    %v1487 = vrot.slane %v1482, %v1486
    %v1488 = vmul.bf16 %v1445, %v1473
    %v1489 = vmul.bf16 %v1446, %v1480
    %v1490 = vmul.bf16 %v1447, %v1487
    %v1492 = vlaneseq
    %v1493 = vshrl.u32 %v1492, 7
    %v1494 = vsub.s32 0, %v1493
    %v1495 = vrot.slane %v578, %v1494
    %v1496 = vlaneseq
    %v1497 = vshrl.u32 %v1496, 7
    %v1498 = vsub.s32 1, %v1497
    %v1499 = vrot.slane %v578, %v1498
    %v1500 = vlaneseq
    %v1501 = vshrl.u32 %v1500, 7
    %v1502 = vsub.s32 2, %v1501
    %v1503 = vrot.slane %v578, %v1502
    %v1507 = vpack.c.bf16 %v1495, %v1495
    %v1508 = vpack.c.bf16 %v1499, %v1499
    %v1509 = vpack.c.bf16 %v1503, %v1503
    %v1511 = vpack.i.b16 %v1507, %v1507
    %v1513 = vlaneseq
    %v1514 = vshrl.u32 %v1513, 7
    %v1515 = vsub.s32 0, %v1514
    %v1516 = vrot.slane %v1511, %v1515
    %v1518 = vpack.i.b16 %v1508, %v1508
    %v1520 = vlaneseq
    %v1521 = vshrl.u32 %v1520, 7
    %v1522 = vsub.s32 0, %v1521
    %v1523 = vrot.slane %v1518, %v1522
    %v1525 = vpack.i.b16 %v1509, %v1509
    %v1527 = vlaneseq
    %v1528 = vshrl.u32 %v1527, 7
    %v1529 = vsub.s32 0, %v1528
    %v1530 = vrot.slane %v1525, %v1529
    %v1531 = vadd.bf16 %v1488, %v1516
    %v1532 = vadd.bf16 %v1489, %v1523
    %v1533 = vadd.bf16 %v1490, %v1530
    %v1534 = vmax.bf16 %v1531, 0
    %v1535 = vmax.bf16 %v1532, 0
    %v1536 = vmax.bf16 %v1533, 0
    %s1537 = scalar_lea.vmem [#allocation8], 6
    %v1538 = vld [vmem:[%s1537] ss:$8 sm:$0x3]
    %s1539 = scalar_lea.vmem [#allocation8], 7
    %v1540 = vld [vmem:[%s1539] ss:$8 sm:$0x3]
    %s1541 = scalar_lea.vmem [#allocation8], 32
    %v1542 = vld [vmem:[%s1541] ss:$8 sm:$0x3]
    %v1543 = vld [vmem:[#allocation7] sm:$0xff]
    %v1544 = vld [vmem:[#allocation7 + $0x8] sm:$0xff]
    %v1545 = vld [vmem:[#allocation7 + $0x10] sm:$0xff]
    %v1546 = vld [vmem:[#allocation7 + $0x18] sm:$0xff]
    %v1547 = vld [vmem:[#allocation7 + $0x20] sm:$0xff]
    %v1548 = vld [vmem:[#allocation7 + $0x28] sm:$0xff]
    %v1549 = vld [vmem:[#allocation7 + $0x30] sm:$0xff]
    %v1550 = vld [vmem:[#allocation7 + $0x38] sm:$0xff]
    %v1551 = vld [vmem:[#allocation7 + $0x40] sm:$0xff]
    %v1552 = vld [vmem:[#allocation7 + $0x48] sm:$0xff]
    %v1553 = vld [vmem:[#allocation7 + $0x50] sm:$0xff]
    %v1554 = vld [vmem:[#allocation7 + $0x58] sm:$0xff]
    %v1555 = vld [vmem:[#allocation7 + $0x60] sm:$0xff]
    %v1556 = vld [vmem:[#allocation7 + $0x68] sm:$0xff]
    %v1557 = vld [vmem:[#allocation7 + $0x70] sm:$0xff]
    %v1558 = vld [vmem:[#allocation7 + $0x78] sm:$0xff]
    %v1559 = vld [vmem:[#allocation7 + $0x80] sm:$0xff]
    %v1560 = vld [vmem:[#allocation7 + $0x88] sm:$0xff]
    %v1561 = vld [vmem:[#allocation7 + $0x90] sm:$0xff]
    %v1562 = vld [vmem:[#allocation7 + $0x98] sm:$0xff]
    %v1563 = vld [vmem:[#allocation7 + $0xa0] sm:$0xff]
    %v1564 = vld [vmem:[#allocation7 + $0xa8] sm:$0xff]
    %v1565 = vld [vmem:[#allocation7 + $0xb0] sm:$0xff]
    %v1566 = vld [vmem:[#allocation7 + $0xb8] sm:$0xff]
    %v1567 = vld [vmem:[#allocation7 + $0xc0] sm:$0xff]
    %v1568 = vld [vmem:[#allocation7 + $0xc8] sm:$0xff]
    %v1569 = vld [vmem:[#allocation7 + $0xd0] sm:$0xff]
    %v1570 = vld [vmem:[#allocation7 + $0xd8] sm:$0xff]
    %v1571 = vld [vmem:[#allocation7 + $0xe0] sm:$0xff]
    %v1572 = vld [vmem:[#allocation7 + $0xe8] sm:$0xff]
    %v1573 = vld [vmem:[#allocation7 + $0xf0] sm:$0xff]
    %v1574 = vld [vmem:[#allocation7 + $0xf8] sm:$0xff]
    %v1575 = vld [vmem:[#allocation7 + $0x100] sm:$0xff]
    %v1576 = vld [vmem:[#allocation7 + $0x108] sm:$0xff]
    %v1577 = vld [vmem:[#allocation7 + $0x110] sm:$0xff]
    %v1578 = vld [vmem:[#allocation7 + $0x118] sm:$0xff]
    %v1579 = vld [vmem:[#allocation7 + $0x120] sm:$0xff]
    %v1580 = vld [vmem:[#allocation7 + $0x128] sm:$0xff]
    %v1581 = vld [vmem:[#allocation7 + $0x130] sm:$0xff]
    %v1582 = vld [vmem:[#allocation7 + $0x138] sm:$0xff]
    %v1583 = vld [vmem:[#allocation7 + $0x140] sm:$0xff]
    %v1584 = vld [vmem:[#allocation7 + $0x148] sm:$0xff]
    %v1585 = vld [vmem:[#allocation7 + $0x150] sm:$0xff]
    %v1586 = vld [vmem:[#allocation7 + $0x158] sm:$0xff]
    %v1587 = vld [vmem:[#allocation7 + $0x160] sm:$0xff]
    %v1588 = vld [vmem:[#allocation7 + $0x168] sm:$0xff]
    %v1589 = vld [vmem:[#allocation7 + $0x170] sm:$0xff]
    %v1590 = vld [vmem:[#allocation7 + $0x178] sm:$0xff]
    %v1592 = vlaneseq
    %v1593 = vshrl.u32 %v1592, 7
    %v1594 = vsub.s32 0, %v1593
    %v1595 = vrot.slane %v1538, %v1594
    %v1596 = vlaneseq
    %v1597 = vshrl.u32 %v1596, 7
    %v1598 = vsub.s32 1, %v1597
    %v1599 = vrot.slane %v1538, %v1598
    %v1650 = vunpack.c.l.b16 %v1543
    %v1651 = vunpack.c.h.b16 %v1543
    %v1652 = vunpack.c.l.b16 %v1544
    %v1653 = vunpack.c.h.b16 %v1544
    %v1654 = vunpack.c.l.b16 %v1545
    %v1655 = vunpack.c.h.b16 %v1545
    %v1656 = vunpack.c.l.b16 %v1546
    %v1657 = vunpack.c.h.b16 %v1546
    %v1658 = vunpack.c.l.b16 %v1547
    %v1659 = vunpack.c.h.b16 %v1547
    %v1660 = vunpack.c.l.b16 %v1548
    %v1661 = vunpack.c.h.b16 %v1548
    %v1662 = vunpack.c.l.b16 %v1549
    %v1663 = vunpack.c.h.b16 %v1549
    %v1664 = vunpack.c.l.b16 %v1550
    %v1665 = vunpack.c.h.b16 %v1550
    %v1666 = vunpack.c.l.b16 %v1551
    %v1667 = vunpack.c.h.b16 %v1551
    %v1668 = vunpack.c.l.b16 %v1552
    %v1669 = vunpack.c.h.b16 %v1552
    %v1670 = vunpack.c.l.b16 %v1553
    %v1671 = vunpack.c.h.b16 %v1553
    %v1672 = vunpack.c.l.b16 %v1554
    %v1673 = vunpack.c.h.b16 %v1554
    %v1674 = vunpack.c.l.b16 %v1555
    %v1675 = vunpack.c.h.b16 %v1555
    %v1676 = vunpack.c.l.b16 %v1556
    %v1677 = vunpack.c.h.b16 %v1556
    %v1678 = vunpack.c.l.b16 %v1557
    %v1679 = vunpack.c.h.b16 %v1557
    %v1680 = vunpack.c.l.b16 %v1558
    %v1681 = vunpack.c.h.b16 %v1558
    %v1682 = vunpack.c.l.b16 %v1559
    %v1683 = vunpack.c.h.b16 %v1559
    %v1684 = vunpack.c.l.b16 %v1560
    %v1685 = vunpack.c.h.b16 %v1560
    %v1686 = vunpack.c.l.b16 %v1561
    %v1687 = vunpack.c.h.b16 %v1561
    %v1688 = vunpack.c.l.b16 %v1562
    %v1689 = vunpack.c.h.b16 %v1562
    %v1690 = vunpack.c.l.b16 %v1563
    %v1691 = vunpack.c.h.b16 %v1563
    %v1692 = vunpack.c.l.b16 %v1564
    %v1693 = vunpack.c.h.b16 %v1564
    %v1694 = vunpack.c.l.b16 %v1565
    %v1695 = vunpack.c.h.b16 %v1565
    %v1696 = vunpack.c.l.b16 %v1566
    %v1697 = vunpack.c.h.b16 %v1566
    %v1698 = vunpack.c.l.b16 %v1567
    %v1699 = vunpack.c.h.b16 %v1567
    %v1700 = vunpack.c.l.b16 %v1568
    %v1701 = vunpack.c.h.b16 %v1568
    %v1702 = vunpack.c.l.b16 %v1569
    %v1703 = vunpack.c.h.b16 %v1569
    %v1704 = vunpack.c.l.b16 %v1570
    %v1705 = vunpack.c.h.b16 %v1570
    %v1706 = vunpack.c.l.b16 %v1571
    %v1707 = vunpack.c.h.b16 %v1571
    %v1708 = vunpack.c.l.b16 %v1572
    %v1709 = vunpack.c.h.b16 %v1572
    %v1710 = vunpack.c.l.b16 %v1573
    %v1711 = vunpack.c.h.b16 %v1573
    %v1712 = vunpack.c.l.b16 %v1574
    %v1713 = vunpack.c.h.b16 %v1574
    %v1714 = vunpack.c.l.b16 %v1575
    %v1715 = vunpack.c.h.b16 %v1575
    %v1716 = vunpack.c.l.b16 %v1576
    %v1717 = vunpack.c.h.b16 %v1576
    %v1718 = vunpack.c.l.b16 %v1577
    %v1719 = vunpack.c.h.b16 %v1577
    %v1720 = vunpack.c.l.b16 %v1578
    %v1721 = vunpack.c.h.b16 %v1578
    %v1722 = vunpack.c.l.b16 %v1579
    %v1723 = vunpack.c.h.b16 %v1579
    %v1724 = vunpack.c.l.b16 %v1580
    %v1725 = vunpack.c.h.b16 %v1580
    %v1726 = vunpack.c.l.b16 %v1581
    %v1727 = vunpack.c.h.b16 %v1581
    %v1728 = vunpack.c.l.b16 %v1582
    %v1729 = vunpack.c.h.b16 %v1582
    %v1730 = vunpack.c.l.b16 %v1583
    %v1731 = vunpack.c.h.b16 %v1583
    %v1732 = vunpack.c.l.b16 %v1584
    %v1733 = vunpack.c.h.b16 %v1584
    %v1734 = vunpack.c.l.b16 %v1585
    %v1735 = vunpack.c.h.b16 %v1585
    %v1736 = vunpack.c.l.b16 %v1586
    %v1737 = vunpack.c.h.b16 %v1586
    %v1738 = vunpack.c.l.b16 %v1587
    %v1739 = vunpack.c.h.b16 %v1587
    %v1740 = vunpack.c.l.b16 %v1588
    %v1741 = vunpack.c.h.b16 %v1588
    %v1742 = vunpack.c.l.b16 %v1589
    %v1743 = vunpack.c.h.b16 %v1589
    %v1744 = vunpack.c.l.b16 %v1590
    %v1745 = vunpack.c.h.b16 %v1590
    %v1746 = vpack.c.b16 %v1652, %v1650
    %v1747 = vpack.c.b16 %v1653, %v1651
    %v1748 = vpack.c.b16 %v1656, %v1654
    %v1749 = vpack.c.b16 %v1657, %v1655
    %v1750 = vpack.c.b16 %v1660, %v1658
    %v1751 = vpack.c.b16 %v1661, %v1659
    %v1752 = vpack.c.b16 %v1664, %v1662
    %v1753 = vpack.c.b16 %v1665, %v1663
    %v1754 = vpack.c.b16 %v1668, %v1666
    %v1755 = vpack.c.b16 %v1669, %v1667
    %v1756 = vpack.c.b16 %v1672, %v1670
    %v1757 = vpack.c.b16 %v1673, %v1671
    %v1758 = vpack.c.b16 %v1676, %v1674
    %v1759 = vpack.c.b16 %v1677, %v1675
    %v1760 = vpack.c.b16 %v1680, %v1678
    %v1761 = vpack.c.b16 %v1681, %v1679
    %v1762 = vpack.c.b16 %v1684, %v1682
    %v1763 = vpack.c.b16 %v1685, %v1683
    %v1764 = vpack.c.b16 %v1688, %v1686
    %v1765 = vpack.c.b16 %v1689, %v1687
    %v1766 = vpack.c.b16 %v1692, %v1690
    %v1767 = vpack.c.b16 %v1693, %v1691
    %v1768 = vpack.c.b16 %v1696, %v1694
    %v1769 = vpack.c.b16 %v1697, %v1695
    %v1770 = vpack.c.b16 %v1700, %v1698
    %v1771 = vpack.c.b16 %v1701, %v1699
    %v1772 = vpack.c.b16 %v1704, %v1702
    %v1773 = vpack.c.b16 %v1705, %v1703
    %v1774 = vpack.c.b16 %v1708, %v1706
    %v1775 = vpack.c.b16 %v1709, %v1707
    %v1776 = vpack.c.b16 %v1712, %v1710
    %v1777 = vpack.c.b16 %v1713, %v1711
    %v1778 = vpack.c.b16 %v1716, %v1714
    %v1779 = vpack.c.b16 %v1717, %v1715
    %v1780 = vpack.c.b16 %v1720, %v1718
    %v1781 = vpack.c.b16 %v1721, %v1719
    %v1782 = vpack.c.b16 %v1724, %v1722
    %v1783 = vpack.c.b16 %v1725, %v1723
    %v1784 = vpack.c.b16 %v1728, %v1726
    %v1785 = vpack.c.b16 %v1729, %v1727
    %v1786 = vpack.c.b16 %v1732, %v1730
    %v1787 = vpack.c.b16 %v1733, %v1731
    %v1788 = vpack.c.b16 %v1736, %v1734
    %v1789 = vpack.c.b16 %v1737, %v1735
    %v1790 = vpack.c.b16 %v1740, %v1738
    %v1791 = vpack.c.b16 %v1741, %v1739
    %v1792 = vpack.c.b16 %v1744, %v1742
    %v1793 = vpack.c.b16 %v1745, %v1743
    %1842 = vmatprep.subr.bf16.mxu0 %v1747
    %1843 = vmatpush1.bf16.msra.mxu0 %v1746
    %1844 = vmatprep.subr.bf16.mxu0 %v1749
    %1845 = vmatpush1.bf16.msra.mxu0 %v1748
    %1846 = vmatprep.subr.bf16.mxu0 %v1751
    %1847 = vmatpush1.bf16.msra.mxu0 %v1750
    %1848 = vmatprep.subr.bf16.mxu0 %v1753
    %1849 = vmatpush1.bf16.msra.mxu0 %v1752
    %1850 = vmatprep.subr.bf16.mxu0 %v1755
    %1851 = vmatpush1.bf16.msra.mxu0 %v1754
    %1852 = vmatprep.subr.bf16.mxu0 %v1757
    %1853 = vmatpush1.bf16.msra.mxu0 %v1756
    %1854 = vmatprep.subr.bf16.mxu0 %v1759
    %1855 = vmatpush1.bf16.msra.mxu0 %v1758
    %1856 = vmatprep.subr.bf16.mxu0 %v1761
    %1857 = vmatpush1.bf16.msra.mxu0 %v1760
    %1858 = vmatprep.subr.bf16.mxu0 %v1763
    %1859 = vmatpush1.bf16.msra.mxu0 %v1762
    %1860 = vmatprep.subr.bf16.mxu0 %v1765
    %1861 = vmatpush1.bf16.msra.mxu0 %v1764
    %1862 = vmatprep.subr.bf16.mxu0 %v1767
    %1863 = vmatpush1.bf16.msra.mxu0 %v1766
    %1864 = vmatprep.subr.bf16.mxu0 %v1769
    %1865 = vmatpush1.bf16.msra.mxu0 %v1768
    %1866 = vmatprep.subr.bf16.mxu0 %v1771
    %1867 = vmatpush1.bf16.msra.mxu0 %v1770
    %1868 = vmatprep.subr.bf16.mxu0 %v1773
    %1869 = vmatpush1.bf16.msra.mxu0 %v1772
    %1870 = vmatprep.subr.bf16.mxu0 %v1775
    %1871 = vmatpush1.bf16.msra.mxu0 %v1774
    %1872 = vmatprep.subr.bf16.mxu0 %v1777
    %1873 = vmatpush1.bf16.msra.mxu0 %v1776
    %1874 = vmatprep.mubr.bf16.mxu0 %v1535
    %1875 = vmatmul.mubr.bf16.gmra.mrb[0].mxu0 %v1534
    %v1876 = vpop.f32.mrb[0].mxu0
    %v1877 = vadd.f32 %v1595, %v1876
    %v1878 = vpop.f32.mrb[0].mxu0
    %v1879 = vadd.f32 %v1599, %v1878
    %v1880 = vpop.f32.mrb[0].mxu0
    %v1881 = vadd.f32 %v1595, %v1880
    %v1882 = vpop.f32.mrb[0].mxu0
    %v1883 = vadd.f32 %v1599, %v1882
    %1884 = vdwg.mxu0
    %1885 = vmatprep.subr.bf16.mxu0 %v1779
    %1886 = vmatpush1.bf16.msra.mxu0 %v1778
    %1887 = vmatprep.subr.bf16.mxu0 %v1781
    %1888 = vmatpush1.bf16.msra.mxu0 %v1780
    %1889 = vmatprep.subr.bf16.mxu0 %v1783
    %1890 = vmatpush1.bf16.msra.mxu0 %v1782
    %1891 = vmatprep.subr.bf16.mxu0 %v1785
    %1892 = vmatpush1.bf16.msra.mxu0 %v1784
    %1893 = vmatprep.subr.bf16.mxu0 %v1787
    %1894 = vmatpush1.bf16.msra.mxu0 %v1786
    %1895 = vmatprep.subr.bf16.mxu0 %v1789
    %1896 = vmatpush1.bf16.msra.mxu0 %v1788
    %1897 = vmatprep.subr.bf16.mxu0 %v1791
    %1898 = vmatpush1.bf16.msra.mxu0 %v1790
    %1899 = vmatprep.subr.bf16.mxu0 %v1793
    %1900 = vmatpush1.bf16.msra.mxu0 %v1792
    %1901 = vmatprep.subr.bf16.mxu0 0
    %1902 = vmatpush1.bf16.msra.mxu0 0
    %1903 = vmatprep.subr.bf16.mxu0 0
    %1904 = vmatpush1.bf16.msra.mxu0 0
    %1905 = vmatprep.subr.bf16.mxu0 0
    %1906 = vmatpush1.bf16.msra.mxu0 0
    %1907 = vmatprep.subr.bf16.mxu0 0
    %1908 = vmatpush1.bf16.msra.mxu0 0
    %1909 = vmatprep.subr.bf16.mxu0 0
    %1910 = vmatpush1.bf16.msra.mxu0 0
    %1911 = vmatprep.subr.bf16.mxu0 0
    %1912 = vmatpush1.bf16.msra.mxu0 0
    %1913 = vmatprep.subr.bf16.mxu0 0
    %1914 = vmatpush1.bf16.msra.mxu0 0
    %1915 = vmatprep.subr.bf16.mxu0 0
    %1916 = vmatpush1.bf16.msra.mxu0 0
    %1917 = vmatprep.mubr.bf16.mxu0 0
    %1918 = vmatmul.mubr.bf16.gmra.mrb[0].mxu0 %v1536
    %v1919 = vpop.f32.mrb[0].mxu0
    %v1920 = vadd.f32 %v1877, %v1919
    %v1921 = vpop.f32.mrb[0].mxu0
    %v1922 = vadd.f32 %v1879, %v1921
    %v1923 = vpop.f32.mrb[0].mxu0
    %v1924 = vadd.f32 %v1881, %v1923
    %v1925 = vpop.f32.mrb[0].mxu0
    %v1926 = vadd.f32 %v1883, %v1925
    %1927 = vdwg.mxu0
    %v1928 = vadd.f32 %v1920, %v1922
    %1929 = vadd.xlane.f32.xlu0 %v1928
    %v1930 = vpop.xlane.xlu0 %1929
    %v1931 = vadd.f32 %v1924, %v1926
    %1932 = vadd.xlane.f32.xlu0 %v1931
    %v1933 = vpop.xlane.xlu0 %1932
    %v1934 = vmul.f32 %v1930, 0.00390625
    %v1935 = vmul.f32 %v1933, 0.00390625
    %v1936 = vsub.f32 %v1920, %v1934
    %v1937 = vsub.f32 %v1922, %v1934
    %v1938 = vsub.f32 %v1924, %v1935
    %v1939 = vsub.f32 %v1926, %v1935
    %v1940 = vmul.f32 %v1936, %v1936
    %v1941 = vmul.f32 %v1937, %v1937
    %v1942 = vmul.f32 %v1938, %v1938
    %v1943 = vmul.f32 %v1939, %v1939
    %v1944 = vadd.f32 %v1940, %v1941
    %1945 = vadd.xlane.f32.xlu0 %v1944
    %v1946 = vpop.xlane.xlu0 %1945
    %v1947 = vadd.f32 %v1942, %v1943
    %1948 = vadd.xlane.f32.xlu0 %v1947
    %v1949 = vpop.xlane.xlu0 %1948
    %v1950 = vmul.f32 %v1946, 0.00390625
    %v1951 = vmul.f32 %v1949, 0.00390625
    %v1952 = vadd.f32 %v1950, 1e-05
    %v1953 = vadd.f32 %v1951, 1e-05
    %v1954 = vrsqrt.pop %v1952
    %v1955 = vrsqrt.pop %v1953
    %v1956 = vmul.f32 %v1936, %v1954
    %v1957 = vmul.f32 %v1937, %v1954
    %v1958 = vmul.f32 %v1938, %v1955
    %v1959 = vmul.f32 %v1939, %v1955
    %v1960 = vpack.c.bf16 %v1958, %v1956
    %v1961 = vpack.c.bf16 %v1959, %v1957
    %v1963 = vlaneseq
    %v1964 = vshrl.u32 %v1963, 7
    %v1965 = vsub.s32 0, %v1964
    %v1966 = vrot.slane %v1540, %v1965
    %v1967 = vlaneseq
    %v1968 = vshrl.u32 %v1967, 7
    %v1969 = vsub.s32 1, %v1968
    %v1970 = vrot.slane %v1540, %v1969
    %v1973 = vpack.c.bf16 %v1966, %v1966
    %v1974 = vpack.c.bf16 %v1970, %v1970
    %v1976 = vpack.i.b16 %v1973, %v1973
    %v1978 = vlaneseq
    %v1979 = vshrl.u32 %v1978, 7
    %v1980 = vsub.s32 0, %v1979
    %v1981 = vrot.slane %v1976, %v1980
    %v1983 = vpack.i.b16 %v1974, %v1974
    %v1985 = vlaneseq
    %v1986 = vshrl.u32 %v1985, 7
    %v1987 = vsub.s32 0, %v1986
    %v1988 = vrot.slane %v1983, %v1987
    %v1989 = vmul.bf16 %v1960, %v1981
    %v1990 = vmul.bf16 %v1961, %v1988
    %v1992 = vlaneseq
    %v1993 = vshrl.u32 %v1992, 7
    %v1994 = vsub.s32 0, %v1993
    %v1995 = vrot.slane %v1542, %v1994
    %v1996 = vlaneseq
    %v1997 = vshrl.u32 %v1996, 7
    %v1998 = vsub.s32 1, %v1997
    %v1999 = vrot.slane %v1542, %v1998
    %v2002 = vpack.c.bf16 %v1995, %v1995
    %v2003 = vpack.c.bf16 %v1999, %v1999
    %v2005 = vpack.i.b16 %v2002, %v2002
    %v2007 = vlaneseq
    %v2008 = vshrl.u32 %v2007, 7
    %v2009 = vsub.s32 0, %v2008
    %v2010 = vrot.slane %v2005, %v2009
    %v2012 = vpack.i.b16 %v2003, %v2003
    %v2014 = vlaneseq
    %v2015 = vshrl.u32 %v2014, 7
    %v2016 = vsub.s32 0, %v2015
    %v2017 = vrot.slane %v2012, %v2016
    %v2018 = vadd.bf16 %v1989, %v2010
    %v2019 = vadd.bf16 %v1990, %v2017
    %v2020 = vmax.bf16 %v2018, 0
    %v2021 = vmax.bf16 %v2019, 0
    %v2022 = vld [vmem:[#allocation8 + $0x21] ss:$0 sm:$0xff]
    %v2023 = vld [vmem:[#allocation8 + $0x22] ss:$0 sm:$0xff]
    %v2024 = vld [vmem:[#allocation8 + $0x23] ss:$0 sm:$0xff]
    %v2025 = vld [vmem:[%s4] sm:$0xf]
    %v2026 = vld [vmem:[%s4 + $0x4] sm:$0xf]
    %v2027 = vld [vmem:[%s4 + $0x8] sm:$0xf]
    %v2028 = vld [vmem:[%s4 + $0xc] sm:$0xf]
    %v2029 = vld [vmem:[%s4 + $0x10] sm:$0xf]
    %v2030 = vld [vmem:[%s4 + $0x14] sm:$0xf]
    %v2031 = vld [vmem:[%s4 + $0x18] sm:$0xf]
    %v2032 = vld [vmem:[%s4 + $0x1c] sm:$0xf]
    %v2033 = vld [vmem:[%s4 + $0x20] sm:$0xf]
    %v2034 = vld [vmem:[%s4 + $0x24] sm:$0xf]
    %v2035 = vld [vmem:[%s4 + $0x28] sm:$0xf]
    %v2036 = vld [vmem:[%s4 + $0x2c] sm:$0xf]
    %v2037 = vld [vmem:[%s4 + $0x30] sm:$0xf]
    %v2038 = vld [vmem:[%s4 + $0x34] sm:$0xf]
    %v2039 = vld [vmem:[%s4 + $0x38] sm:$0xf]
    %v2040 = vld [vmem:[%s4 + $0x3c] sm:$0xf]
    %v2041 = vld [vmem:[%s4 + $0x40] sm:$0xf]
    %v2042 = vld [vmem:[%s4 + $0x44] sm:$0xf]
    %v2043 = vld [vmem:[%s4 + $0x48] sm:$0xf]
    %v2044 = vld [vmem:[%s4 + $0x4c] sm:$0xf]
    %v2045 = vld [vmem:[%s4 + $0x50] sm:$0xf]
    %v2046 = vld [vmem:[%s4 + $0x54] sm:$0xf]
    %v2047 = vld [vmem:[%s4 + $0x58] sm:$0xf]
    %v2048 = vld [vmem:[%s4 + $0x5c] sm:$0xf]
    %v2049 = vld [vmem:[%s4 + $0x60] sm:$0xf]
    %v2050 = vld [vmem:[%s4 + $0x64] sm:$0xf]
    %v2051 = vld [vmem:[%s4 + $0x68] sm:$0xf]
    %v2052 = vld [vmem:[%s4 + $0x6c] sm:$0xf]
    %v2053 = vld [vmem:[%s4 + $0x70] sm:$0xf]
    %v2054 = vld [vmem:[%s4 + $0x74] sm:$0xf]
    %v2055 = vld [vmem:[%s4 + $0x78] sm:$0xf]
    %v2056 = vld [vmem:[%s4 + $0x7c] sm:$0xf]
    %v2089 = vunpack.c.l.b16 %v2025
    %v2090 = vunpack.c.l.b16 %v2026
    %v2091 = vunpack.c.l.b16 %v2027
    %v2092 = vunpack.c.l.b16 %v2028
    %v2093 = vunpack.c.l.b16 %v2029
    %v2094 = vunpack.c.l.b16 %v2030
    %v2095 = vunpack.c.l.b16 %v2031
    %v2096 = vunpack.c.l.b16 %v2032
    %v2097 = vunpack.c.l.b16 %v2033
    %v2098 = vunpack.c.l.b16 %v2034
    %v2099 = vunpack.c.l.b16 %v2035
    %v2100 = vunpack.c.l.b16 %v2036
    %v2101 = vunpack.c.l.b16 %v2037
    %v2102 = vunpack.c.l.b16 %v2038
    %v2103 = vunpack.c.l.b16 %v2039
    %v2104 = vunpack.c.l.b16 %v2040
    %v2105 = vunpack.c.l.b16 %v2041
    %v2106 = vunpack.c.l.b16 %v2042
    %v2107 = vunpack.c.l.b16 %v2043
    %v2108 = vunpack.c.l.b16 %v2044
    %v2109 = vunpack.c.l.b16 %v2045
    %v2110 = vunpack.c.l.b16 %v2046
    %v2111 = vunpack.c.l.b16 %v2047
    %v2112 = vunpack.c.l.b16 %v2048
    %v2113 = vunpack.c.l.b16 %v2049
    %v2114 = vunpack.c.l.b16 %v2050
    %v2115 = vunpack.c.l.b16 %v2051
    %v2116 = vunpack.c.l.b16 %v2052
    %v2117 = vunpack.c.l.b16 %v2053
    %v2118 = vunpack.c.l.b16 %v2054
    %v2119 = vunpack.c.l.b16 %v2055
    %v2120 = vunpack.c.l.b16 %v2056
    %v2121 = vpack.c.b16 %v2090, %v2089
    %v2122 = vpack.c.b16 %v2092, %v2091
    %v2123 = vpack.c.b16 %v2094, %v2093
    %v2124 = vpack.c.b16 %v2096, %v2095
    %v2125 = vpack.c.b16 %v2098, %v2097
    %v2126 = vpack.c.b16 %v2100, %v2099
    %v2127 = vpack.c.b16 %v2102, %v2101
    %v2128 = vpack.c.b16 %v2104, %v2103
    %v2129 = vpack.c.b16 %v2106, %v2105
    %v2130 = vpack.c.b16 %v2108, %v2107
    %v2131 = vpack.c.b16 %v2110, %v2109
    %v2132 = vpack.c.b16 %v2112, %v2111
    %v2133 = vpack.c.b16 %v2114, %v2113
    %v2134 = vpack.c.b16 %v2116, %v2115
    %v2135 = vpack.c.b16 %v2118, %v2117
    %v2136 = vpack.c.b16 %v2120, %v2119
    %2153 = vmatprep.subr.bf16.mxu0 0
    %2154 = vmatpush1.bf16.msra.mxu0 %v2121
    %2155 = vmatprep.subr.bf16.mxu0 0
    %2156 = vmatpush1.bf16.msra.mxu0 %v2122
    %2157 = vmatprep.subr.bf16.mxu0 0
    %2158 = vmatpush1.bf16.msra.mxu0 %v2123
    %2159 = vmatprep.subr.bf16.mxu0 0
    %2160 = vmatpush1.bf16.msra.mxu0 %v2124
    %2161 = vmatprep.subr.bf16.mxu0 0
    %2162 = vmatpush1.bf16.msra.mxu0 %v2125
    %2163 = vmatprep.subr.bf16.mxu0 0
    %2164 = vmatpush1.bf16.msra.mxu0 %v2126
    %2165 = vmatprep.subr.bf16.mxu0 0
    %2166 = vmatpush1.bf16.msra.mxu0 %v2127
    %2167 = vmatprep.subr.bf16.mxu0 0
    %2168 = vmatpush1.bf16.msra.mxu0 %v2128
    %2169 = vmatprep.subr.bf16.mxu0 0
    %2170 = vmatpush1.bf16.msra.mxu0 %v2129
    %2171 = vmatprep.subr.bf16.mxu0 0
    %2172 = vmatpush1.bf16.msra.mxu0 %v2130
    %2173 = vmatprep.subr.bf16.mxu0 0
    %2174 = vmatpush1.bf16.msra.mxu0 %v2131
    %2175 = vmatprep.subr.bf16.mxu0 0
    %2176 = vmatpush1.bf16.msra.mxu0 %v2132
    %2177 = vmatprep.subr.bf16.mxu0 0
    %2178 = vmatpush1.bf16.msra.mxu0 %v2133
    %2179 = vmatprep.subr.bf16.mxu0 0
    %2180 = vmatpush1.bf16.msra.mxu0 %v2134
    %2181 = vmatprep.subr.bf16.mxu0 0
    %2182 = vmatpush1.bf16.msra.mxu0 %v2135
    %2183 = vmatprep.subr.bf16.mxu0 0
    %2184 = vmatpush1.bf16.msra.mxu0 %v2136
    %2185 = vmatprep.mubr.bf16.mxu0 %v2021
    %2186 = vmatmul.mubr.bf16.gmra.mrb[0].mxu0 %v2020
    %v2187 = vpop.f32.mrb[0].mxu0
    %v2188 = vadd.f32 %v2022, %v2187
    %v2189 = vpop.f32.mrb[0].mxu0
    %v2190 = vpop.f32.mrb[0].mxu0
    %v2191 = vadd.f32 %v2022, %v2190
    %v2192 = vpop.f32.mrb[0].mxu0
    %2193 = vdwg.mxu0
    %2194 = vadd.xlane.f32.xlu0 %v2188
    %v2195 = vpop.xlane.xlu0 %2194
    %2196 = vadd.xlane.f32.xlu0 %v2191
    %v2197 = vpop.xlane.xlu0 %2196
    %v2198 = vmul.f32 %v2195, 0.0078125
    %v2199 = vmul.f32 %v2197, 0.0078125
    %v2200 = vsub.f32 %v2188, %v2198
    %v2201 = vsub.f32 %v2191, %v2199
    %v2202 = vmul.f32 %v2200, %v2200
    %v2203 = vmul.f32 %v2201, %v2201
    %2204 = vadd.xlane.f32.xlu0 %v2202
    %v2205 = vpop.xlane.xlu0 %2204
    %2206 = vadd.xlane.f32.xlu0 %v2203
    %v2207 = vpop.xlane.xlu0 %2206
    %v2208 = vmul.f32 %v2205, 0.0078125
    %v2209 = vmul.f32 %v2207, 0.0078125
    %v2210 = vadd.f32 %v2208, 1e-05
    %v2211 = vadd.f32 %v2209, 1e-05
    %v2212 = vrsqrt.pop %v2210
    %v2213 = vrsqrt.pop %v2211
    %v2214 = vmul.f32 %v2200, %v2212
    %v2215 = vmul.f32 %v2201, %v2213
    %v2216 = vpack.c.bf16 %v2215, %v2214
    %v2217 = vpack.c.bf16 %v2023, %v2023
    %v2218 = vmul.bf16 %v2216, %v2217
    %v2219 = vpack.c.bf16 %v2024, %v2024
    %v2220 = vadd.bf16 %v2218, %v2219
    %v2221 = vmax.bf16 %v2220, 0
    %v2222 = vld [vmem:[#allocation8 + $0x24] ss:$0 sm:$0xff]
    %v2223 = vld [vmem:[#allocation8 + $0x25] ss:$0 sm:$0xff]
    %v2224 = vld [vmem:[#allocation8 + $0x26] ss:$0 sm:$0xff]
    %v2225 = vld [vmem:[%s5] sm:$0xf]
    %v2226 = vld [vmem:[%s5 + $0x4] sm:$0xf]
    %v2227 = vld [vmem:[%s5 + $0x8] sm:$0xf]
    %v2228 = vld [vmem:[%s5 + $0xc] sm:$0xf]
    %v2229 = vld [vmem:[%s5 + $0x10] sm:$0xf]
    %v2230 = vld [vmem:[%s5 + $0x14] sm:$0xf]
    %v2231 = vld [vmem:[%s5 + $0x18] sm:$0xf]
    %v2232 = vld [vmem:[%s5 + $0x1c] sm:$0xf]
    %v2233 = vld [vmem:[%s5 + $0x20] sm:$0xf]
    %v2234 = vld [vmem:[%s5 + $0x24] sm:$0xf]
    %v2235 = vld [vmem:[%s5 + $0x28] sm:$0xf]
    %v2236 = vld [vmem:[%s5 + $0x2c] sm:$0xf]
    %v2237 = vld [vmem:[%s5 + $0x30] sm:$0xf]
    %v2238 = vld [vmem:[%s5 + $0x34] sm:$0xf]
    %v2239 = vld [vmem:[%s5 + $0x38] sm:$0xf]
    %v2240 = vld [vmem:[%s5 + $0x3c] sm:$0xf]
    %v2257 = vunpack.c.l.b16 %v2225
    %v2258 = vunpack.c.l.b16 %v2226
    %v2259 = vunpack.c.l.b16 %v2227
    %v2260 = vunpack.c.l.b16 %v2228
    %v2261 = vunpack.c.l.b16 %v2229
    %v2262 = vunpack.c.l.b16 %v2230
    %v2263 = vunpack.c.l.b16 %v2231
    %v2264 = vunpack.c.l.b16 %v2232
    %v2265 = vunpack.c.l.b16 %v2233
    %v2266 = vunpack.c.l.b16 %v2234
    %v2267 = vunpack.c.l.b16 %v2235
    %v2268 = vunpack.c.l.b16 %v2236
    %v2269 = vunpack.c.l.b16 %v2237
    %v2270 = vunpack.c.l.b16 %v2238
    %v2271 = vunpack.c.l.b16 %v2239
    %v2272 = vunpack.c.l.b16 %v2240
    %v2273 = vpack.c.b16 %v2258, %v2257
    %v2274 = vpack.c.b16 %v2260, %v2259
    %v2275 = vpack.c.b16 %v2262, %v2261
    %v2276 = vpack.c.b16 %v2264, %v2263
    %v2277 = vpack.c.b16 %v2266, %v2265
    %v2278 = vpack.c.b16 %v2268, %v2267
    %v2279 = vpack.c.b16 %v2270, %v2269
    %v2280 = vpack.c.b16 %v2272, %v2271
    %2289 = vmatprep.subr.bf16.mxu0 0
    %2290 = vmatpush1.bf16.msra.mxu0 %v2273
    %2291 = vmatprep.subr.bf16.mxu0 0
    %2292 = vmatpush1.bf16.msra.mxu0 %v2274
    %2293 = vmatprep.subr.bf16.mxu0 0
    %2294 = vmatpush1.bf16.msra.mxu0 %v2275
    %2295 = vmatprep.subr.bf16.mxu0 0
    %2296 = vmatpush1.bf16.msra.mxu0 %v2276
    %2297 = vmatprep.subr.bf16.mxu0 0
    %2298 = vmatpush1.bf16.msra.mxu0 %v2277
    %2299 = vmatprep.subr.bf16.mxu0 0
    %2300 = vmatpush1.bf16.msra.mxu0 %v2278
    %2301 = vmatprep.subr.bf16.mxu0 0
    %2302 = vmatpush1.bf16.msra.mxu0 %v2279
    %2303 = vmatprep.subr.bf16.mxu0 0
    %2304 = vmatpush1.bf16.msra.mxu0 %v2280
    %2305 = vmatprep.subr.bf16.mxu0 0
    %2306 = vmatpush1.bf16.msra.mxu0 0
    %2307 = vmatprep.subr.bf16.mxu0 0
    %2308 = vmatpush1.bf16.msra.mxu0 0
    %2309 = vmatprep.subr.bf16.mxu0 0
    %2310 = vmatpush1.bf16.msra.mxu0 0
    %2311 = vmatprep.subr.bf16.mxu0 0
    %2312 = vmatpush1.bf16.msra.mxu0 0
    %2313 = vmatprep.subr.bf16.mxu0 0
    %2314 = vmatpush1.bf16.msra.mxu0 0
    %2315 = vmatprep.subr.bf16.mxu0 0
    %2316 = vmatpush1.bf16.msra.mxu0 0
    %2317 = vmatprep.subr.bf16.mxu0 0
    %2318 = vmatpush1.bf16.msra.mxu0 0
    %2319 = vmatprep.subr.bf16.mxu0 0
    %2320 = vmatpush1.bf16.msra.mxu0 0
    %2321 = vmatprep.mubr.bf16.mxu0 0
    %2322 = vmatmul.mubr.bf16.gmra.mrb[0].mxu0 %v2221
    %v2323 = vpop.f32.mrb[0].mxu0
    %v2324 = vadd.f32 %v2222, %v2323
    %v2325 = vpop.f32.mrb[0].mxu0
    %v2326 = vpop.f32.mrb[0].mxu0
    %v2327 = vadd.f32 %v2222, %v2326
    %v2328 = vpop.f32.mrb[0].mxu0
    %2329 = vdwg.mxu0
    %vm2330 = vcmask 523264
    %v2331 = vsel %vm2330, %v2324, 0.0
    %2332 = vadd.xlane.f32.xlu0 %v2331
    %v2333 = vpop.xlane.xlu0 %2332
    %v2334 = vsel %vm2330, %v2327, 0.0
    %2335 = vadd.xlane.f32.xlu0 %v2334
    %v2336 = vpop.xlane.xlu0 %2335
    %v2337 = vmul.f32 %v2333, 0.015625
    %v2338 = vmul.f32 %v2336, 0.015625
    %v2339 = vsub.f32 %v2324, %v2337
    %v2340 = vsub.f32 %v2327, %v2338
    %v2341 = vmul.f32 %v2339, %v2339
    %v2342 = vmul.f32 %v2340, %v2340
    %v2343 = vsel %vm2330, %v2341, 0.0
    %2344 = vadd.xlane.f32.xlu0 %v2343
    %v2345 = vpop.xlane.xlu0 %2344
    %v2346 = vsel %vm2330, %v2342, 0.0
    %2347 = vadd.xlane.f32.xlu0 %v2346
    %v2348 = vpop.xlane.xlu0 %2347
    %v2349 = vmul.f32 %v2345, 0.015625
    %v2350 = vmul.f32 %v2348, 0.015625
    %v2351 = vadd.f32 %v2349, 1e-05
    %v2352 = vadd.f32 %v2350, 1e-05
    %v2353 = vrsqrt.pop %v2351
    %v2354 = vrsqrt.pop %v2352
    %v2355 = vmul.f32 %v2339, %v2353
    %v2356 = vmul.f32 %v2340, %v2354
    %v2357 = vpack.c.bf16 %v2356, %v2355
    %v2358 = vpack.c.bf16 %v2223, %v2223
    %v2359 = vmul.bf16 %v2357, %v2358
    %v2360 = vpack.c.bf16 %v2224, %v2224
    %v2361 = vadd.bf16 %v2359, %v2360
    %v2362 = vmax.bf16 %v2361, 0
    %v2363 = vld [vmem:[#allocation8 + $0x27] ss:$0 sm:$0xff]
    %v2364 = vpack.c.bf16 %v2363, %v2363
    %v2365 = vld [vmem:[#allocation2] sm:$0x1]
    %2367 = vset.pattern.permute.xlu0 0
    %2368 = vperm.xlu0 %2367, %v2365
    %v2369 = vpop.permute.xlu0 %2368
    %v2371 = vlaneseq
    %v2372 = vshrl.u32 %v2371, 7
    %v2373 = vsub.s32 0, %v2372
    %v2374 = vrot.slane %v2369, %v2373
    %v2376 = vsel %vm2330, %v2364, 0
    %v2379 = vsel %vm2330, %v2362, 0
    %2381 = vmatprep.subr.bf16.mxu0 0
    %2382 = vmatpush1.bf16.xpose.msra.mxu0 %v2379
    %2383 = vmatprep.subr.bf16.mxu0 0
    %2384 = vmatpush1.bf16.xpose.msra.mxu0 0
    %2385 = vmatprep.subr.bf16.mxu0 0
    %2386 = vmatpush1.bf16.xpose.msra.mxu0 0
    %2387 = vmatprep.subr.bf16.mxu0 0
    %2388 = vmatpush1.bf16.xpose.msra.mxu0 0
    %2389 = vmatprep.subr.bf16.mxu0 0
    %2390 = vmatpush1.bf16.xpose.msra.mxu0 0
    %2391 = vmatprep.subr.bf16.mxu0 0
    %2392 = vmatpush1.bf16.xpose.msra.mxu0 0
    %2393 = vmatprep.subr.bf16.mxu0 0
    %2394 = vmatpush1.bf16.xpose.msra.mxu0 0
    %2395 = vmatprep.subr.bf16.mxu0 0
    %2396 = vmatpush1.bf16.xpose.msra.mxu0 0
    %2397 = vmatprep.subr.bf16.mxu0 0
    %2398 = vmatpush1.bf16.xpose.msra.mxu0 0
    %2399 = vmatprep.subr.bf16.mxu0 0
    %2400 = vmatpush1.bf16.xpose.msra.mxu0 0
    %2401 = vmatprep.subr.bf16.mxu0 0
    %2402 = vmatpush1.bf16.xpose.msra.mxu0 0
    %2403 = vmatprep.subr.bf16.mxu0 0
    %2404 = vmatpush1.bf16.xpose.msra.mxu0 0
    %2405 = vmatprep.subr.bf16.mxu0 0
    %2406 = vmatpush1.bf16.xpose.msra.mxu0 0
    %2407 = vmatprep.subr.bf16.mxu0 0
    %2408 = vmatpush1.bf16.xpose.msra.mxu0 0
    %2409 = vmatprep.subr.bf16.mxu0 0
    %2410 = vmatpush1.bf16.xpose.msra.mxu0 0
    %2411 = vmatprep.subr.bf16.mxu0 0
    %2412 = vmatpush1.bf16.xpose.msra.mxu0 0
    %2413 = vmatprep.mubr.bf16.mxu0 0
    %2414 = vmatmul.mubr.bf16.gmra.mrb[0].mxu0 %v2376
    %v2415 = vpop.f32.mrb[0].mxu0
    %v2416 = vadd.f32 %v2374, %v2415
    %v2417 = vpop.f32.mrb[0].mxu0
    %v2418 = vpop.f32.mrb[0].mxu0
    %v2419 = vpop.f32.mrb[0].mxu0
    %2420 = vdwg.mxu0
    %vm2421 = vcmask 122880
    %2422 = vst.msk [vmem:[%s8] sm:$0x1] %vm2421, %v2416
    // Predicated region
    $region50: #{mlp_forward.1} parent=1 // pred_check
      _
    $region51: #{mlp_forward.1} parent=1 // pred_check_branch
      %2424 = sbr.rel (0) target = $region53
    $region52: #{mlp_forward.1} parent=1 // pred_region
      _
    $region53: #{mlp_forward.1} parent=1 // pred_fallthru
      _
    // Predicated region
    $region54: #{mlp_forward.1} parent=1 // pred_check
      _
    $region55: #{mlp_forward.1} parent=1 // pred_check_branch
      %2426 = sbr.rel (0) target = $region57
    $region56: #{mlp_forward.1} parent=1 // pred_region
      _
    $region57: #{mlp_forward.1} parent=1 // pred_fallthru
      _
    %2427 = vsyncpa [#allocation4], 1
    %2428 = vsyncpa [#allocation6], 1
    %2429 = vsyncpa [#allocation9], 1

</llo_original>
